<compile_context>
chip_gen: v6e
topology: v6e:2x2x1
jax: 0.10.0
libtpu: 0.0.40
codegen_flags: <defaults>
</compile_context>

<pallas_src>
import numpy as np
import jax
import jax.numpy as jnp
from jax.experimental import pallas as pl
from jax.experimental.pallas import tpu as pltpu


def _mm(a, b, dims=None):
    """MXU matmul: bf16 operands (no-op cast if already bf16), f32 accumulation."""
    a = a.astype(jnp.bfloat16)
    b = b.astype(jnp.bfloat16)
    if dims is None:
        return jnp.dot(a, b, preferred_element_type=jnp.float32)
    return jax.lax.dot_general(a, b, (dims, ((), ())),
                               preferred_element_type=jnp.float32)


# ----------------------------------------------------------------------------
# Fused Seg_R kernel (one grid step == one batch element, both modules fused)
# ----------------------------------------------------------------------------
def _make_seg_r_kernel(ci, n2, n4, n2s, n4s, out_w):
    o_d1, o_d2 = 0, n2                      # column offsets inside the input slab
    o_a1, o_a2 = n2 + n4, n2 + n4 + n2s
    pad_w = out_w - (392 + n2s + n4s)       # lane padding of the output slab

    def kernel(xs_ref, pw_ref, sw_ref, cw_ref, bias_ref, s2_ref, s4_ref, o_ref):
        f32 = jnp.float32
        xs = xs_ref[0]                       # (C+1, Ntot) bf16, constant-1 row last
        pw = pw_ref[...]                     # (8Ci, C+1) bf16, bias column last

        # ONE wide projection matmul covers g1/phi/g2/theta for BOTH modules,
        # with their biases folded in via the constant-1 input row.
        proj = _mm(pw, xs)                   # (8Ci, Ntot) f32

        sw = sw_ref[...]                     # (8Ci, Ci)  bf16: [W,Q,m1,m2] per module
        cw = cw_ref[...]                     # (2Ci, 2Ci) bf16: [conv1; conv2]
        bias = bias_ref[...].astype(f32)     # (Ci, 10)   f32 bias columns

        def bcol(j):
            return bias[:, j:j + 1]

        def cos_attn(m, det_off, nd, aim_off, na):
            rd = 2 * ci * m                  # g1/phi row block of module m
            ra = 4 * ci + 2 * ci * m         # g2/theta row block of module m
            detect_t = proj[rd:rd + ci,          det_off:det_off + nd]   # g1(detect)+b
            phi_x    = proj[rd + ci:rd + 2 * ci, det_off:det_off + nd]   # phi(detect)+b
            aim_t    = proj[ra:ra + ci,          aim_off:aim_off + na]   # g2(aim)+b
            theta_x  = proj[ra + ci:ra + 2 * ci, aim_off:aim_off + na]   # theta(aim)+b

            # Non-local aggregation, reassociated so the (Na, Nd) affinity matrix is
            # never materialized (identical math, far fewer MACs):
            #   non_aim = (detect_t @ phi_x^T) @ theta_x / Nd
            #   non_det = (aim_t   @ theta_x^T) @ phi_x  / Na
            gram_d = _mm(detect_t, phi_x, dims=((1,), (1,)))     # (Ci, Ci)
            gram_a = _mm(aim_t, theta_x, dims=((1,), (1,)))      # (Ci, Ci)
            non_aim = _mm(gram_d, theta_x) * (1.0 / nd)          # (Ci, Na)
            non_det = _mm(gram_a, phi_x) * (1.0 / na)            # (Ci, Nd)

            s = 4 * ci * m
            W_w, Q_w   = sw[s:s + ci],          sw[s + ci:s + 2 * ci]
            m1_w, m2_w = sw[s + 2 * ci:s + 3 * ci], sw[s + 3 * ci:s + 4 * ci]
            b0 = 4 * m

            # W / Q: 1x1 conv + eval-mode BN folded (host-side) into weight + bias
            # column, then residual add (gamma=beta=0 at init -> pure residual).
            non_aim = _mm(W_w, non_aim) + bcol(b0 + 0) + aim_t
            non_det = _mm(Q_w, non_det) + bcol(b0 + 1) + detect_t

            # ChannelGate(non_aim): avg & max spatial pools through ONE batched MLP.
            pooled = jnp.concatenate(
                [jnp.sum(non_aim, axis=1, keepdims=True) * (1.0 / na),
                 jnp.max(non_aim, axis=1, keepdims=True)], axis=1)       # (Ci, 2)
            h = jnp.maximum(_mm(m1_w, pooled) + bcol(b0 + 2), 0.0)
            g = _mm(m2_w, h) + bcol(b0 + 3)
            gate = jax.nn.sigmoid(g[:, 0:1] + g[:, 1:2])                 # (Ci, 1)
            return non_det * gate, non_aim * gate

        act_det1, act_aim1 = cos_attn(0, o_d1, n2, o_a1, n2s)   # index_c , index_s
        act_det2, act_aim2 = cos_attn(1, o_d2, n4, o_a2, n4s)   # index_c2, index_s2

        # conv(cat[up14(A), up14(B)]) == (Wl @ A) @ S_A + (Wr @ B) @ S_B + b
        # (the 1x1 channel mix commutes with the pure column-select upsample).
        c1l, c1r = cw[0:ci, 0:ci],       cw[0:ci, ci:2 * ci]
        c2l, c2r = cw[ci:2 * ci, 0:ci],  cw[ci:2 * ci, ci:2 * ci]
        md1, ma1 = _mm(c1l, act_det1), _mm(c1r, act_aim1)
        md2, ma2 = _mm(c2l, act_det2), _mm(c2r, act_aim2)

        # bf16 one-hot column-select matmuls (deliberate single-pass MXU precision,
        # consistent with the rest of the kernel).
        s2, s4 = s2_ref[...], s4_ref[...]
        y2 = _mm(md1, s2[:n2]) + _mm(ma1, s2[n2:]) + bcol(8)     # (Ci, 196)
        y4 = _mm(md2, s4[:n4]) + _mm(ma2, s4[n4:]) + bcol(9)     # (Ci, 196)

        # Single lane-dense output slab -> one store, one output DMA per step.
        pieces = [y2, y4, act_aim1, act_aim2]
        if pad_w > 0:
            pieces.append(jnp.zeros((ci, pad_w), f32))
        o_ref[0] = jnp.concatenate(pieces, axis=1).astype(o_ref.dtype)

    return kernel


# ----------------------------------------------------------------------------
# Parameter init (deterministic, mirrors the PyTorch shapes, channels-first)
# ----------------------------------------------------------------------------
def init_cos_attn_params(key, in_channels):
    ci = max(in_channels // 4, 1)
    ks = jax.random.split(key, 16)

    def mat(k, cout, cin, scale=0.1):
        return jax.random.normal(k, (cout, cin), jnp.float32) * scale

    def colv(k, c, scale=0.05):
        return jax.random.normal(k, (c, 1), jnp.float32) * scale

    zc = jnp.zeros((ci, 1), jnp.float32)
    return dict(
        g1_w=mat(ks[0], ci, in_channels),  g1_b=colv(ks[1], ci),
        g2_w=mat(ks[2], ci, 32),           g2_b=colv(ks[3], ci),
        theta_w=mat(ks[4], ci, 32),        theta_b=colv(ks[5], ci),
        phi_w=mat(ks[6], ci, in_channels), phi_b=colv(ks[7], ci),
        # W / Q: 1x1 conv + BatchNorm folded to an affine; PyTorch __init__ zero-inits
        # BN gamma AND beta, so scale = shift = 0 (kept as params).
        W_w=mat(ks[8], ci, ci),  W_b=colv(ks[9], ci),  W_s=zc, W_sh=zc,
        Q_w=mat(ks[10], ci, ci), Q_b=colv(ks[11], ci), Q_s=zc, Q_sh=zc,
        # ChannelGate MLP (reduction_ratio=1): Linear(Ci,Ci) -> ReLU -> Linear(Ci,Ci)
        m1_w=mat(ks[12], ci, ci), m1_b=colv(ks[13], ci),
        m2_w=mat(ks[14], ci, ci), m2_b=colv(ks[15], ci),
    )


def init_seg_r_params(key, input_channels):
    k1, k2, k3, k4, k5, k6 = jax.random.split(key, 6)
    half, quarter = input_channels // 2, input_channels // 4
    return dict(
        attn1=init_cos_attn_params(k1, input_channels),
        attn2=init_cos_attn_params(k2, input_channels),
        conv1_w=jax.random.normal(k3, (quarter, half), jnp.float32) * 0.1,
        conv1_b=jax.random.normal(k4, (quarter, 1), jnp.float32) * 0.05,
        conv2_w=jax.random.normal(k5, (quarter, half), jnp.float32) * 0.1,
        conv2_b=jax.random.normal(k6, (quarter, 1), jnp.float32) * 0.05,
    )


def pack_seg_r_params(p):
    """Pack 20+ parameter arrays into 4 (mostly bf16) arrays; fold biases/affines."""
    a1, a2 = p["attn1"], p["attn2"]
    ci = a1["g1_w"].shape[0]
    cin = a1["g1_w"].shape[1]
    ca = a1["g2_w"].shape[1]            # 32 in the reference module
    C = max(cin, ca)
    bf = jnp.bfloat16

    def padw(w):                        # zero-pad weight columns to the common C
        if w.shape[1] < C:
            w = jnp.concatenate([w, jnp.zeros((w.shape[0], C - w.shape[1]), w.dtype)],
                                axis=1)
        return w

    def wb(w, b):                       # (Ci, C+1): padded weight + bias column
        return jnp.concatenate([padw(w), b], axis=1)

    # row blocks: [g1_1; phi_1; g1_2; phi_2; g2_1; theta_1; g2_2; theta_2]
    proj_w = jnp.concatenate([
        wb(a1["g1_w"], a1["g1_b"]), wb(a1["phi_w"], a1["phi_b"]),
        wb(a2["g1_w"], a2["g1_b"]), wb(a2["phi_w"], a2["phi_b"]),
        wb(a1["g2_w"], a1["g2_b"]), wb(a1["theta_w"], a1["theta_b"]),
        wb(a2["g2_w"], a2["g2_b"]), wb(a2["theta_w"], a2["theta_b"]),
    ], axis=0).astype(bf)                                        # (8Ci, C+1)

    def fold(ww, wbias, wscale, wshift):   # (conv + b) then BN affine folded
        return ww * wscale, wscale * wbias + wshift

    W1w, W1b = fold(a1["W_w"], a1["W_b"], a1["W_s"], a1["W_sh"])
    Q1w, Q1b = fold(a1["Q_w"], a1["Q_b"], a1["Q_s"], a1["Q_sh"])
    W2w, W2b = fold(a2["W_w"], a2["W_b"], a2["W_s"], a2["W_sh"])
    Q2w, Q2b = fold(a2["Q_w"], a2["Q_b"], a2["Q_s"], a2["Q_sh"])

    sw = jnp.concatenate([W1w, Q1w, a1["m1_w"], a1["m2_w"],
                          W2w, Q2w, a2["m1_w"], a2["m2_w"]], axis=0).astype(bf)  # (8Ci, Ci)
    bias = jnp.concatenate([W1b, Q1b, a1["m1_b"], a1["m2_b"],
                            W2b, Q2b, a2["m1_b"], a2["m2_b"],
                            p["conv1_b"], p["conv2_b"]], axis=1).astype(jnp.float32)  # (Ci, 10)
    cw = jnp.concatenate([p["conv1_w"], p["conv2_w"]], axis=0).astype(bf)        # (2Ci, 2Ci)

    return dict(proj_w=proj_w, sw=sw, bias=bias, cw=cw)


def _up14_select(h, w, out=14):
    """(h*w, out*out) one-hot matrix: X(C, h*w) @ S == nearest-upsampled X(C, out*out).
    PyTorch UpsamplingNearest2d: src = floor(dst * in / out)."""
    ih = (np.arange(out) * h) // out
    iw = (np.arange(out) * w) // out
    src = (ih[:, None] * w + iw[None, :]).reshape(-1)
    sel = np.zeros((h * w, out * out), np.float32)
    sel[src, np.arange(out * out)] = 1.0
    return sel


# ----------------------------------------------------------------------------
# Seg_R forward (single fused pallas_call)
# ----------------------------------------------------------------------------
@jax.jit
def seg_r_forward(x2_s, x4_s, x2, x4, packed):
    B, cin, h2, w2 = x2.shape
    _, ca, h2s, w2s = x2_s.shape
    _, _, h4, w4 = x4.shape
    _, _, h4s, w4s = x4_s.shape
    ci = packed["bias"].shape[0]
    n2, n4, n2s, n4s = h2 * w2, h4 * w4, h2s * w2s, h4s * w4s
    ntot = n2 + n4 + n2s + n4s
    C = max(cin, ca)
    out_w = -(-(392 + n2s + n4s) // 128) * 128    # 2*196 + n2s + n4s, lane-padded

    # Lane-dense input slab: columns [det1 | det2 | aim1 | aim2], channel rows padded
    # to C, plus a constant-1 row (folds the projection biases into the matmul).
    def flat(x, n):
        b, c, _, _ = x.shape
        xf = x.reshape(b, c, n)
        if c < C:
            xf = jnp.concatenate([xf, jnp.zeros((b, C - c, n), xf.dtype)], axis=1)
        return xf

    slab = jnp.concatenate([flat(x2, n2), flat(x4, n4),
                            flat(x2_s, n2s), flat(x4_s, n4s)], axis=2)
    slab = jnp.concatenate([slab, jnp.ones((B, 1, ntot), slab.dtype)], axis=1)
    slab = slab.astype(jnp.bfloat16)                              # (B, C+1, ntot)

    # constant nearest-upsample one-hot select matrices (0/1 exact in bf16)
    s2p = jnp.asarray(np.concatenate([_up14_select(h2, w2),
                                      _up14_select(h2s, w2s)], axis=0), jnp.bfloat16)
    s4p = jnp.asarray(np.concatenate([_up14_select(h4, w4),
                                      _up14_select(h4s, w4s)], axis=0), jnp.bfloat16)

    proj_w, sw, bias, cw = (packed[k] for k in ("proj_w", "sw", "bias", "cw"))

    def full(a):                     # whole (small, bf16) constant resident every step
        idx = (0,) * a.ndim
        return pl.BlockSpec(a.shape, lambda b, _i=idx: _i)

    # Advisory cost hint (kernel is dispatch / constant-DMA bound at this size).
    def mod_macs(nd, na):
        return ci * ci * (4 * nd + 4 * na + 4) + ci * 196 * (nd + na)
    macs = B * (8 * ci * (C + 1) * ntot + mod_macs(n2, n2s) + mod_macs(n4, n4s))
    consts = (slab, proj_w, sw, bias, cw, s2p, s4p)
    bytes_acc = sum(int(a.size) * a.dtype.itemsize for a in consts) + B * ci * out_w * 4
    cost = pl.CostEstimate(flops=2 * macs, transcendentals=4 * B * ci,
                           bytes_accessed=int(bytes_acc))

    kernel = _make_seg_r_kernel(ci, n2, n4, n2s, n4s, out_w)

    out = pl.pallas_call(
        kernel,
        grid=(B,),
        in_specs=[pl.BlockSpec((1, C + 1, ntot), lambda b: (b, 0, 0)),
                  full(proj_w), full(sw), full(cw), full(bias), full(s2p), full(s4p)],
        out_specs=pl.BlockSpec((1, ci, out_w), lambda b: (b, 0, 0)),
        out_shape=jax.ShapeDtypeStruct((B, ci, out_w), jnp.float32),
        compiler_params=pltpu.CompilerParams(dimension_semantics=("parallel",)),
        cost_estimate=cost,
    )(slab, proj_w, sw, cw, bias, s2p, s4p)

    # split the lane-dense output slab back into the PyTorch NCHW outputs
    y2 = out[:, :, 0:196].reshape(B, ci, 14, 14)
    y4 = out[:, :, 196:392].reshape(B, ci, 14, 14)
    ind_s = out[:, :, 392:392 + n2s].reshape(B, ci, h2s, w2s)
    ind_s2 = out[:, :, 392 + n2s:392 + n2s + n4s].reshape(B, ci, h4s, w4s)
    return y2, y4, ind_s, ind_s2


if __name__ == "__main__":
    key = jax.random.PRNGKey(0)
    B = 2
    input_channels = 32          # detect channels; aim branch is fixed at 32 channels
    k1, k2, k3, k4, kp = jax.random.split(key, 5)

    x2_s = jax.random.normal(k1, (B, 32, 8, 8), jnp.float32)
    x4_s = jax.random.normal(k2, (B, 32, 4, 4), jnp.float32)
    x2 = jax.random.normal(k3, (B, input_channels, 8, 8), jnp.float32)
    x4 = jax.random.normal(k4, (B, input_channels, 4, 4), jnp.float32)

    params = init_seg_r_params(kp, input_channels)
    packed = pack_seg_r_params(params)

    outs = seg_r_forward(x2_s, x4_s, x2, x4, packed)
    outs = jax.block_until_ready(outs)

    ci = input_channels // 4
    assert outs[0].shape == (B, ci, 14, 14)
    assert outs[1].shape == (B, ci, 14, 14)
    assert outs[2].shape == (B, ci, 8, 8)
    assert outs[3].shape == (B, ci, 4, 4)
    assert all(bool(jnp.isfinite(o).all()) for o in outs)
    print("KERNEL_OK")
</pallas_src>

<mosaic_0001>
module attributes {stable_mosaic.version = 11 : i64} {
  func.func @kernel(%arg0: i32, %arg1: memref<1x33x160xbf16, #tpu.memory_space<vmem>>, %arg2: memref<64x33xbf16, #tpu.memory_space<vmem>>, %arg3: memref<64x8xbf16, #tpu.memory_space<vmem>>, %arg4: memref<16x16xbf16, #tpu.memory_space<vmem>>, %arg5: memref<8x10xf32, #tpu.memory_space<vmem>>, %arg6: memref<128x196xbf16, #tpu.memory_space<vmem>>, %arg7: memref<32x196xbf16, #tpu.memory_space<vmem>>, %arg8: memref<1x8x512xf32, #tpu.memory_space<vmem>>) attributes {dimension_semantics = [#tpu.dimension_semantics<parallel>], iteration_bounds = array<i64: 2>, scalar_prefetch = 0 : i64, scratch_operands = 0 : i64, tpu.core_type = #tpu.core_type<tc>, window_params = [{transform_indices = @transform_0, window_bounds = array<i64: 1, 33, 160>}, {pipeline_mode = #tpu.pipeline_mode<synchronous>, transform_indices = @transform_1, window_bounds = array<i64: 64, 33>}, {pipeline_mode = #tpu.pipeline_mode<synchronous>, transform_indices = @transform_2, window_bounds = array<i64: 64, 8>}, {pipeline_mode = #tpu.pipeline_mode<synchronous>, transform_indices = @transform_3, window_bounds = array<i64: 16, 16>}, {pipeline_mode = #tpu.pipeline_mode<synchronous>, transform_indices = @transform_4, window_bounds = array<i64: 8, 10>}, {pipeline_mode = #tpu.pipeline_mode<synchronous>, transform_indices = @transform_5, window_bounds = array<i64: 128, 196>}, {pipeline_mode = #tpu.pipeline_mode<synchronous>, transform_indices = @transform_6, window_bounds = array<i64: 32, 196>}, {transform_indices = @transform_7, window_bounds = array<i64: 1, 8, 512>}]} {
    %c0 = arith.constant 0 : index
    %c0_0 = arith.constant 0 : index
    %c0_1 = arith.constant 0 : index
    %0 = vector.load %arg1[%c0, %c0_0, %c0_1] : memref<1x33x160xbf16, #tpu.memory_space<vmem>>, vector<1x33x160xbf16>
    %1 = vector.shape_cast %0 : vector<1x33x160xbf16> to vector<33x160xbf16>
    %c0_2 = arith.constant 0 : index
    %c0_3 = arith.constant 0 : index
    %2 = vector.load %arg2[%c0_2, %c0_3] : memref<64x33xbf16, #tpu.memory_space<vmem>>, vector<64x33xbf16>
    %cst = arith.constant dense<0.000000e+00> : vector<64x160xf32>
    %3 = tpu.matmul %2, %1, %cst {dimension_numbers = #tpu.dot_dimension_numbers<[1], [0], [0], [1], [0, 0, 1, 1], [], []>} : vector<64x33xbf16>, vector<33x160xbf16>, vector<64x160xf32> -> vector<64x160xf32>
    %c0_4 = arith.constant 0 : index
    %c0_5 = arith.constant 0 : index
    %4 = vector.load %arg3[%c0_4, %c0_5] : memref<64x8xbf16, #tpu.memory_space<vmem>>, vector<64x8xbf16>
    %c0_6 = arith.constant 0 : index
    %c0_7 = arith.constant 0 : index
    %5 = vector.load %arg4[%c0_6, %c0_7] : memref<16x16xbf16, #tpu.memory_space<vmem>>, vector<16x16xbf16>
    %c0_8 = arith.constant 0 : index
    %c0_9 = arith.constant 0 : index
    %6 = vector.load %arg5[%c0_8, %c0_9] : memref<8x10xf32, #tpu.memory_space<vmem>>, vector<8x10xf32>
    %7 = vector.extract_strided_slice %3 {offsets = [0, 0], sizes = [8, 64], strides = [1, 1]} : vector<64x160xf32> to vector<8x64xf32>
    %8 = vector.extract_strided_slice %3 {offsets = [8, 0], sizes = [8, 64], strides = [1, 1]} : vector<64x160xf32> to vector<8x64xf32>
    %9 = vector.extract_strided_slice %3 {offsets = [32, 80], sizes = [8, 64], strides = [1, 1]} : vector<64x160xf32> to vector<8x64xf32>
    %10 = vector.extract_strided_slice %3 {offsets = [40, 80], sizes = [8, 64], strides = [1, 1]} : vector<64x160xf32> to vector<8x64xf32>
    %11 = arith.truncf %7 : vector<8x64xf32> to vector<8x64xbf16>
    %12 = arith.truncf %8 : vector<8x64xf32> to vector<8x64xbf16>
    %cst_10 = arith.constant dense<0.000000e+00> : vector<8x8xf32>
    %13 = tpu.matmul %11, %12, %cst_10 {dimension_numbers = #tpu.dot_dimension_numbers<[1], [1], [0], [0], [0, 0, 1, 0], [], []>} : vector<8x64xbf16>, vector<8x64xbf16>, vector<8x8xf32> -> vector<8x8xf32>
    %14 = arith.truncf %9 : vector<8x64xf32> to vector<8x64xbf16>
    %15 = arith.truncf %10 : vector<8x64xf32> to vector<8x64xbf16>
    %cst_11 = arith.constant dense<0.000000e+00> : vector<8x8xf32>
    %16 = tpu.matmul %14, %15, %cst_11 {dimension_numbers = #tpu.dot_dimension_numbers<[1], [1], [0], [0], [0, 0, 1, 0], [], []>} : vector<8x64xbf16>, vector<8x64xbf16>, vector<8x8xf32> -> vector<8x8xf32>
    %17 = arith.truncf %13 : vector<8x8xf32> to vector<8x8xbf16>
    %18 = arith.truncf %10 : vector<8x64xf32> to vector<8x64xbf16>
    %cst_12 = arith.constant dense<0.000000e+00> : vector<8x64xf32>
    %19 = tpu.matmul %17, %18, %cst_12 {dimension_numbers = #tpu.dot_dimension_numbers<[1], [0], [0], [1], [0, 0, 1, 1], [], []>} : vector<8x8xbf16>, vector<8x64xbf16>, vector<8x64xf32> -> vector<8x64xf32>
    %cst_13 = arith.constant 1.562500e-02 : f32
    %20 = vector.broadcast %cst_13 : f32 to vector<8x64xf32>
    %21 = arith.mulf %19, %20 : vector<8x64xf32>
    %22 = arith.truncf %16 : vector<8x8xf32> to vector<8x8xbf16>
    %23 = arith.truncf %8 : vector<8x64xf32> to vector<8x64xbf16>
    %cst_14 = arith.constant dense<0.000000e+00> : vector<8x64xf32>
    %24 = tpu.matmul %22, %23, %cst_14 {dimension_numbers = #tpu.dot_dimension_numbers<[1], [0], [0], [1], [0, 0, 1, 1], [], []>} : vector<8x8xbf16>, vector<8x64xbf16>, vector<8x64xf32> -> vector<8x64xf32>
    %cst_15 = arith.constant 1.562500e-02 : f32
    %25 = vector.broadcast %cst_15 : f32 to vector<8x64xf32>
    %26 = arith.mulf %24, %25 : vector<8x64xf32>
    %27 = vector.extract_strided_slice %4 {offsets = [0, 0], sizes = [8, 8], strides = [1, 1]} : vector<64x8xbf16> to vector<8x8xbf16>
    %28 = vector.extract_strided_slice %4 {offsets = [8, 0], sizes = [8, 8], strides = [1, 1]} : vector<64x8xbf16> to vector<8x8xbf16>
    %29 = vector.extract_strided_slice %4 {offsets = [16, 0], sizes = [8, 8], strides = [1, 1]} : vector<64x8xbf16> to vector<8x8xbf16>
    %30 = vector.extract_strided_slice %4 {offsets = [24, 0], sizes = [8, 8], strides = [1, 1]} : vector<64x8xbf16> to vector<8x8xbf16>
    %31 = arith.truncf %21 : vector<8x64xf32> to vector<8x64xbf16>
    %cst_16 = arith.constant dense<0.000000e+00> : vector<8x64xf32>
    %32 = tpu.matmul %27, %31, %cst_16 {dimension_numbers = #tpu.dot_dimension_numbers<[1], [0], [0], [1], [0, 0, 1, 1], [], []>} : vector<8x8xbf16>, vector<8x64xbf16>, vector<8x64xf32> -> vector<8x64xf32>
    %33 = vector.extract_strided_slice %6 {offsets = [0, 0], sizes = [8, 1], strides = [1, 1]} : vector<8x10xf32> to vector<8x1xf32>
    %34 = vector.broadcast %33 : vector<8x1xf32> to vector<8x64xf32>
    %35 = arith.addf %32, %34 : vector<8x64xf32>
    %36 = arith.addf %35, %9 : vector<8x64xf32>
    %37 = arith.truncf %26 : vector<8x64xf32> to vector<8x64xbf16>
    %cst_17 = arith.constant dense<0.000000e+00> : vector<8x64xf32>
    %38 = tpu.matmul %28, %37, %cst_17 {dimension_numbers = #tpu.dot_dimension_numbers<[1], [0], [0], [1], [0, 0, 1, 1], [], []>} : vector<8x8xbf16>, vector<8x64xbf16>, vector<8x64xf32> -> vector<8x64xf32>
    %39 = vector.extract_strided_slice %6 {offsets = [0, 1], sizes = [8, 1], strides = [1, 1]} : vector<8x10xf32> to vector<8x1xf32>
    %40 = vector.broadcast %39 : vector<8x1xf32> to vector<8x64xf32>
    %41 = arith.addf %38, %40 : vector<8x64xf32>
    %42 = arith.addf %41, %7 : vector<8x64xf32>
    %cst_18 = arith.constant dense<0.000000e+00> : vector<8xf32>
    %43 = vector.multi_reduction <add>, %36, %cst_18 [1] : vector<8x64xf32> to vector<8xf32>
    %44 = vector.shape_cast %43 : vector<8xf32> to vector<8x1xf32>
    %cst_19 = arith.constant 1.562500e-02 : f32
    %45 = vector.broadcast %cst_19 : f32 to vector<8x1xf32>
    %46 = arith.mulf %44, %45 : vector<8x1xf32>
    %cst_20 = arith.constant dense<0xFF800000> : vector<8xf32>
    %47 = vector.multi_reduction <maximumf>, %36, %cst_20 [1] : vector<8x64xf32> to vector<8xf32>
    %48 = vector.shape_cast %47 : vector<8xf32> to vector<8x1xf32>
    %49 = tpu.concatenate %46, %48 in 1 : vector<8x1xf32>, vector<8x1xf32> -> vector<8x2xf32>
    %50 = arith.truncf %49 : vector<8x2xf32> to vector<8x2xbf16>
    %cst_21 = arith.constant dense<0.000000e+00> : vector<8x2xf32>
    %51 = tpu.matmul %29, %50, %cst_21 {dimension_numbers = #tpu.dot_dimension_numbers<[1], [0], [0], [1], [0, 0, 1, 1], [], []>} : vector<8x8xbf16>, vector<8x2xbf16>, vector<8x2xf32> -> vector<8x2xf32>
    %52 = vector.extract_strided_slice %6 {offsets = [0, 2], sizes = [8, 1], strides = [1, 1]} : vector<8x10xf32> to vector<8x1xf32>
    %53 = vector.broadcast %52 : vector<8x1xf32> to vector<8x2xf32>
    %54 = arith.addf %51, %53 : vector<8x2xf32>
    %cst_22 = arith.constant 0.000000e+00 : f32
    %55 = vector.broadcast %cst_22 : f32 to vector<8x2xf32>
    %56 = arith.maximumf %54, %55 : vector<8x2xf32>
    %57 = arith.truncf %56 : vector<8x2xf32> to vector<8x2xbf16>
    %cst_23 = arith.constant dense<0.000000e+00> : vector<8x2xf32>
    %58 = tpu.matmul %30, %57, %cst_23 {dimension_numbers = #tpu.dot_dimension_numbers<[1], [0], [0], [1], [0, 0, 1, 1], [], []>} : vector<8x8xbf16>, vector<8x2xbf16>, vector<8x2xf32> -> vector<8x2xf32>
    %59 = vector.extract_strided_slice %6 {offsets = [0, 3], sizes = [8, 1], strides = [1, 1]} : vector<8x10xf32> to vector<8x1xf32>
    %60 = vector.broadcast %59 : vector<8x1xf32> to vector<8x2xf32>
    %61 = arith.addf %58, %60 : vector<8x2xf32>
    %62 = vector.extract_strided_slice %61 {offsets = [0, 0], sizes = [8, 1], strides = [1, 1]} : vector<8x2xf32> to vector<8x1xf32>
    %63 = vector.extract_strided_slice %61 {offsets = [0, 1], sizes = [8, 1], strides = [1, 1]} : vector<8x2xf32> to vector<8x1xf32>
    %64 = arith.addf %62, %63 : vector<8x1xf32>
    %65 = arith.negf %64 : vector<8x1xf32>
    %66 = math.exp %65 : vector<8x1xf32>
    %cst_24 = arith.constant 1.000000e+00 : f32
    %67 = vector.broadcast %cst_24 : f32 to vector<8x1xf32>
    %68 = arith.addf %67, %66 : vector<8x1xf32>
    %69 = arith.divf %67, %68 : vector<8x1xf32>
    %70 = vector.broadcast %69 : vector<8x1xf32> to vector<8x64xf32>
    %71 = arith.mulf %42, %70 : vector<8x64xf32>
    %72 = vector.broadcast %69 : vector<8x1xf32> to vector<8x64xf32>
    %73 = arith.mulf %36, %72 : vector<8x64xf32>
    %74 = vector.extract_strided_slice %3 {offsets = [16, 64], sizes = [8, 16], strides = [1, 1]} : vector<64x160xf32> to vector<8x16xf32>
    %75 = vector.extract_strided_slice %3 {offsets = [24, 64], sizes = [8, 16], strides = [1, 1]} : vector<64x160xf32> to vector<8x16xf32>
    %76 = vector.extract_strided_slice %3 {offsets = [48, 144], sizes = [8, 16], strides = [1, 1]} : vector<64x160xf32> to vector<8x16xf32>
    %77 = vector.extract_strided_slice %3 {offsets = [56, 144], sizes = [8, 16], strides = [1, 1]} : vector<64x160xf32> to vector<8x16xf32>
    %78 = arith.truncf %74 : vector<8x16xf32> to vector<8x16xbf16>
    %79 = arith.truncf %75 : vector<8x16xf32> to vector<8x16xbf16>
    %cst_25 = arith.constant dense<0.000000e+00> : vector<8x8xf32>
    %80 = tpu.matmul %78, %79, %cst_25 {dimension_numbers = #tpu.dot_dimension_numbers<[1], [1], [0], [0], [0, 0, 1, 0], [], []>} : vector<8x16xbf16>, vector<8x16xbf16>, vector<8x8xf32> -> vector<8x8xf32>
    %81 = arith.truncf %76 : vector<8x16xf32> to vector<8x16xbf16>
    %82 = arith.truncf %77 : vector<8x16xf32> to vector<8x16xbf16>
    %cst_26 = arith.constant dense<0.000000e+00> : vector<8x8xf32>
    %83 = tpu.matmul %81, %82, %cst_26 {dimension_numbers = #tpu.dot_dimension_numbers<[1], [1], [0], [0], [0, 0, 1, 0], [], []>} : vector<8x16xbf16>, vector<8x16xbf16>, vector<8x8xf32> -> vector<8x8xf32>
    %84 = arith.truncf %80 : vector<8x8xf32> to vector<8x8xbf16>
    %85 = arith.truncf %77 : vector<8x16xf32> to vector<8x16xbf16>
    %cst_27 = arith.constant dense<0.000000e+00> : vector<8x16xf32>
    %86 = tpu.matmul %84, %85, %cst_27 {dimension_numbers = #tpu.dot_dimension_numbers<[1], [0], [0], [1], [0, 0, 1, 1], [], []>} : vector<8x8xbf16>, vector<8x16xbf16>, vector<8x16xf32> -> vector<8x16xf32>
    %cst_28 = arith.constant 6.250000e-02 : f32
    %87 = vector.broadcast %cst_28 : f32 to vector<8x16xf32>
    %88 = arith.mulf %86, %87 : vector<8x16xf32>
    %89 = arith.truncf %83 : vector<8x8xf32> to vector<8x8xbf16>
    %90 = arith.truncf %75 : vector<8x16xf32> to vector<8x16xbf16>
    %cst_29 = arith.constant dense<0.000000e+00> : vector<8x16xf32>
    %91 = tpu.matmul %89, %90, %cst_29 {dimension_numbers = #tpu.dot_dimension_numbers<[1], [0], [0], [1], [0, 0, 1, 1], [], []>} : vector<8x8xbf16>, vector<8x16xbf16>, vector<8x16xf32> -> vector<8x16xf32>
    %cst_30 = arith.constant 6.250000e-02 : f32
    %92 = vector.broadcast %cst_30 : f32 to vector<8x16xf32>
    %93 = arith.mulf %91, %92 : vector<8x16xf32>
    %94 = vector.extract_strided_slice %4 {offsets = [32, 0], sizes = [8, 8], strides = [1, 1]} : vector<64x8xbf16> to vector<8x8xbf16>
    %95 = vector.extract_strided_slice %4 {offsets = [40, 0], sizes = [8, 8], strides = [1, 1]} : vector<64x8xbf16> to vector<8x8xbf16>
    %96 = vector.extract_strided_slice %4 {offsets = [48, 0], sizes = [8, 8], strides = [1, 1]} : vector<64x8xbf16> to vector<8x8xbf16>
    %97 = vector.extract_strided_slice %4 {offsets = [56, 0], sizes = [8, 8], strides = [1, 1]} : vector<64x8xbf16> to vector<8x8xbf16>
    %98 = arith.truncf %88 : vector<8x16xf32> to vector<8x16xbf16>
    %cst_31 = arith.constant dense<0.000000e+00> : vector<8x16xf32>
    %99 = tpu.matmul %94, %98, %cst_31 {dimension_numbers = #tpu.dot_dimension_numbers<[1], [0], [0], [1], [0, 0, 1, 1], [], []>} : vector<8x8xbf16>, vector<8x16xbf16>, vector<8x16xf32> -> vector<8x16xf32>
    %100 = vector.extract_strided_slice %6 {offsets = [0, 4], sizes = [8, 1], strides = [1, 1]} : vector<8x10xf32> to vector<8x1xf32>
    %101 = vector.broadcast %100 : vector<8x1xf32> to vector<8x16xf32>
    %102 = arith.addf %99, %101 : vector<8x16xf32>
    %103 = arith.addf %102, %76 : vector<8x16xf32>
    %104 = arith.truncf %93 : vector<8x16xf32> to vector<8x16xbf16>
    %cst_32 = arith.constant dense<0.000000e+00> : vector<8x16xf32>
    %105 = tpu.matmul %95, %104, %cst_32 {dimension_numbers = #tpu.dot_dimension_numbers<[1], [0], [0], [1], [0, 0, 1, 1], [], []>} : vector<8x8xbf16>, vector<8x16xbf16>, vector<8x16xf32> -> vector<8x16xf32>
    %106 = vector.extract_strided_slice %6 {offsets = [0, 5], sizes = [8, 1], strides = [1, 1]} : vector<8x10xf32> to vector<8x1xf32>
    %107 = vector.broadcast %106 : vector<8x1xf32> to vector<8x16xf32>
    %108 = arith.addf %105, %107 : vector<8x16xf32>
    %109 = arith.addf %108, %74 : vector<8x16xf32>
    %cst_33 = arith.constant dense<0.000000e+00> : vector<8xf32>
    %110 = vector.multi_reduction <add>, %103, %cst_33 [1] : vector<8x16xf32> to vector<8xf32>
    %111 = vector.shape_cast %110 : vector<8xf32> to vector<8x1xf32>
    %cst_34 = arith.constant 6.250000e-02 : f32
    %112 = vector.broadcast %cst_34 : f32 to vector<8x1xf32>
    %113 = arith.mulf %111, %112 : vector<8x1xf32>
    %cst_35 = arith.constant dense<0xFF800000> : vector<8xf32>
    %114 = vector.multi_reduction <maximumf>, %103, %cst_35 [1] : vector<8x16xf32> to vector<8xf32>
    %115 = vector.shape_cast %114 : vector<8xf32> to vector<8x1xf32>
    %116 = tpu.concatenate %113, %115 in 1 : vector<8x1xf32>, vector<8x1xf32> -> vector<8x2xf32>
    %117 = arith.truncf %116 : vector<8x2xf32> to vector<8x2xbf16>
    %cst_36 = arith.constant dense<0.000000e+00> : vector<8x2xf32>
    %118 = tpu.matmul %96, %117, %cst_36 {dimension_numbers = #tpu.dot_dimension_numbers<[1], [0], [0], [1], [0, 0, 1, 1], [], []>} : vector<8x8xbf16>, vector<8x2xbf16>, vector<8x2xf32> -> vector<8x2xf32>
    %119 = vector.extract_strided_slice %6 {offsets = [0, 6], sizes = [8, 1], strides = [1, 1]} : vector<8x10xf32> to vector<8x1xf32>
    %120 = vector.broadcast %119 : vector<8x1xf32> to vector<8x2xf32>
    %121 = arith.addf %118, %120 : vector<8x2xf32>
    %cst_37 = arith.constant 0.000000e+00 : f32
    %122 = vector.broadcast %cst_37 : f32 to vector<8x2xf32>
    %123 = arith.maximumf %121, %122 : vector<8x2xf32>
    %124 = arith.truncf %123 : vector<8x2xf32> to vector<8x2xbf16>
    %cst_38 = arith.constant dense<0.000000e+00> : vector<8x2xf32>
    %125 = tpu.matmul %97, %124, %cst_38 {dimension_numbers = #tpu.dot_dimension_numbers<[1], [0], [0], [1], [0, 0, 1, 1], [], []>} : vector<8x8xbf16>, vector<8x2xbf16>, vector<8x2xf32> -> vector<8x2xf32>
    %126 = vector.extract_strided_slice %6 {offsets = [0, 7], sizes = [8, 1], strides = [1, 1]} : vector<8x10xf32> to vector<8x1xf32>
    %127 = vector.broadcast %126 : vector<8x1xf32> to vector<8x2xf32>
    %128 = arith.addf %125, %127 : vector<8x2xf32>
    %129 = vector.extract_strided_slice %128 {offsets = [0, 0], sizes = [8, 1], strides = [1, 1]} : vector<8x2xf32> to vector<8x1xf32>
    %130 = vector.extract_strided_slice %128 {offsets = [0, 1], sizes = [8, 1], strides = [1, 1]} : vector<8x2xf32> to vector<8x1xf32>
    %131 = arith.addf %129, %130 : vector<8x1xf32>
    %132 = arith.negf %131 : vector<8x1xf32>
    %133 = math.exp %132 : vector<8x1xf32>
    %cst_39 = arith.constant 1.000000e+00 : f32
    %134 = vector.broadcast %cst_39 : f32 to vector<8x1xf32>
    %135 = arith.addf %134, %133 : vector<8x1xf32>
    %136 = arith.divf %134, %135 : vector<8x1xf32>
    %137 = vector.broadcast %136 : vector<8x1xf32> to vector<8x16xf32>
    %138 = arith.mulf %109, %137 : vector<8x16xf32>
    %139 = vector.broadcast %136 : vector<8x1xf32> to vector<8x16xf32>
    %140 = arith.mulf %103, %139 : vector<8x16xf32>
    %141 = vector.extract_strided_slice %5 {offsets = [0, 0], sizes = [8, 8], strides = [1, 1]} : vector<16x16xbf16> to vector<8x8xbf16>
    %142 = vector.extract_strided_slice %5 {offsets = [0, 8], sizes = [8, 8], strides = [1, 1]} : vector<16x16xbf16> to vector<8x8xbf16>
    %143 = vector.extract_strided_slice %5 {offsets = [8, 0], sizes = [8, 8], strides = [1, 1]} : vector<16x16xbf16> to vector<8x8xbf16>
    %144 = vector.extract_strided_slice %5 {offsets = [8, 8], sizes = [8, 8], strides = [1, 1]} : vector<16x16xbf16> to vector<8x8xbf16>
    %145 = arith.truncf %71 : vector<8x64xf32> to vector<8x64xbf16>
    %cst_40 = arith.constant dense<0.000000e+00> : vector<8x64xf32>
    %146 = tpu.matmul %141, %145, %cst_40 {dimension_numbers = #tpu.dot_dimension_numbers<[1], [0], [0], [1], [0, 0, 1, 1], [], []>} : vector<8x8xbf16>, vector<8x64xbf16>, vector<8x64xf32> -> vector<8x64xf32>
    %147 = arith.truncf %73 : vector<8x64xf32> to vector<8x64xbf16>
    %cst_41 = arith.constant dense<0.000000e+00> : vector<8x64xf32>
    %148 = tpu.matmul %142, %147, %cst_41 {dimension_numbers = #tpu.dot_dimension_numbers<[1], [0], [0], [1], [0, 0, 1, 1], [], []>} : vector<8x8xbf16>, vector<8x64xbf16>, vector<8x64xf32> -> vector<8x64xf32>
    %149 = arith.truncf %138 : vector<8x16xf32> to vector<8x16xbf16>
    %cst_42 = arith.constant dense<0.000000e+00> : vector<8x16xf32>
    %150 = tpu.matmul %143, %149, %cst_42 {dimension_numbers = #tpu.dot_dimension_numbers<[1], [0], [0], [1], [0, 0, 1, 1], [], []>} : vector<8x8xbf16>, vector<8x16xbf16>, vector<8x16xf32> -> vector<8x16xf32>
    %151 = arith.truncf %140 : vector<8x16xf32> to vector<8x16xbf16>
    %cst_43 = arith.constant dense<0.000000e+00> : vector<8x16xf32>
    %152 = tpu.matmul %144, %151, %cst_43 {dimension_numbers = #tpu.dot_dimension_numbers<[1], [0], [0], [1], [0, 0, 1, 1], [], []>} : vector<8x8xbf16>, vector<8x16xbf16>, vector<8x16xf32> -> vector<8x16xf32>
    %c0_44 = arith.constant 0 : index
    %c0_45 = arith.constant 0 : index
    %153 = vector.load %arg6[%c0_44, %c0_45] : memref<128x196xbf16, #tpu.memory_space<vmem>>, vector<128x196xbf16>
    %c0_46 = arith.constant 0 : index
    %c0_47 = arith.constant 0 : index
    %154 = vector.load %arg7[%c0_46, %c0_47] : memref<32x196xbf16, #tpu.memory_space<vmem>>, vector<32x196xbf16>
    %155 = vector.extract_strided_slice %153 {offsets = [0, 0], sizes = [64, 196], strides = [1, 1]} : vector<128x196xbf16> to vector<64x196xbf16>
    %156 = arith.truncf %146 : vector<8x64xf32> to vector<8x64xbf16>
    %cst_48 = arith.constant dense<0.000000e+00> : vector<8x196xf32>
    %157 = tpu.matmul %156, %155, %cst_48 {dimension_numbers = #tpu.dot_dimension_numbers<[1], [0], [0], [1], [0, 0, 1, 1], [], []>} : vector<8x64xbf16>, vector<64x196xbf16>, vector<8x196xf32> -> vector<8x196xf32>
    %158 = vector.extract_strided_slice %153 {offsets = [64, 0], sizes = [64, 196], strides = [1, 1]} : vector<128x196xbf16> to vector<64x196xbf16>
    %159 = arith.truncf %148 : vector<8x64xf32> to vector<8x64xbf16>
    %cst_49 = arith.constant dense<0.000000e+00> : vector<8x196xf32>
    %160 = tpu.matmul %159, %158, %cst_49 {dimension_numbers = #tpu.dot_dimension_numbers<[1], [0], [0], [1], [0, 0, 1, 1], [], []>} : vector<8x64xbf16>, vector<64x196xbf16>, vector<8x196xf32> -> vector<8x196xf32>
    %161 = arith.addf %157, %160 : vector<8x196xf32>
    %162 = vector.extract_strided_slice %6 {offsets = [0, 8], sizes = [8, 1], strides = [1, 1]} : vector<8x10xf32> to vector<8x1xf32>
    %163 = vector.broadcast %162 : vector<8x1xf32> to vector<8x196xf32>
    %164 = arith.addf %161, %163 : vector<8x196xf32>
    %165 = vector.extract_strided_slice %154 {offsets = [0, 0], sizes = [16, 196], strides = [1, 1]} : vector<32x196xbf16> to vector<16x196xbf16>
    %166 = arith.truncf %150 : vector<8x16xf32> to vector<8x16xbf16>
    %cst_50 = arith.constant dense<0.000000e+00> : vector<8x196xf32>
    %167 = tpu.matmul %166, %165, %cst_50 {dimension_numbers = #tpu.dot_dimension_numbers<[1], [0], [0], [1], [0, 0, 1, 1], [], []>} : vector<8x16xbf16>, vector<16x196xbf16>, vector<8x196xf32> -> vector<8x196xf32>
    %168 = vector.extract_strided_slice %154 {offsets = [16, 0], sizes = [16, 196], strides = [1, 1]} : vector<32x196xbf16> to vector<16x196xbf16>
    %169 = arith.truncf %152 : vector<8x16xf32> to vector<8x16xbf16>
    %cst_51 = arith.constant dense<0.000000e+00> : vector<8x196xf32>
    %170 = tpu.matmul %169, %168, %cst_51 {dimension_numbers = #tpu.dot_dimension_numbers<[1], [0], [0], [1], [0, 0, 1, 1], [], []>} : vector<8x16xbf16>, vector<16x196xbf16>, vector<8x196xf32> -> vector<8x196xf32>
    %171 = arith.addf %167, %170 : vector<8x196xf32>
    %172 = vector.extract_strided_slice %6 {offsets = [0, 9], sizes = [8, 1], strides = [1, 1]} : vector<8x10xf32> to vector<8x1xf32>
    %173 = vector.broadcast %172 : vector<8x1xf32> to vector<8x196xf32>
    %174 = arith.addf %171, %173 : vector<8x196xf32>
    %cst_52 = arith.constant 0.000000e+00 : f32
    %175 = vector.broadcast %cst_52 : f32 to vector<8x40xf32>
    %176 = tpu.concatenate %164, %174, %73, %140, %175 in 1 : vector<8x196xf32>, vector<8x196xf32>, vector<8x64xf32>, vector<8x16xf32>, vector<8x40xf32> -> vector<8x512xf32>
    %c0_53 = arith.constant 0 : index
    %c0_54 = arith.constant 0 : index
    %c0_55 = arith.constant 0 : index
    %177 = vector.load %arg8[%c0_53, %c0_54, %c0_55] : memref<1x8x512xf32, #tpu.memory_space<vmem>>, vector<1x8x512xf32>
    %178 = vector.shape_cast %177 : vector<1x8x512xf32> to vector<8x512xf32>
    %179 = vector.shape_cast %176 : vector<8x512xf32> to vector<1x8x512xf32>
    tpu.vector_store %arg8[%c0_53, %c0_54, %c0_55], %179 {strides = array<i32>} : memref<1x8x512xf32, #tpu.memory_space<vmem>>, vector<1x8x512xf32>,
    return
  }
  func.func @transform_0(%arg0: i32) -> (i32, i32, i32) {
    %c0_i32 = arith.constant 0 : i32
    %c0_i32_0 = arith.constant 0 : i32
    %c0_i32_1 = arith.constant 0 : i32
    return %arg0, %c0_i32, %c0_i32_0 : i32, i32, i32
  }
  func.func @transform_1(%arg0: i32) -> (i32, i32) {
    %c0_i32 = arith.constant 0 : i32
    %c0_i32_0 = arith.constant 0 : i32
    %c0_i32_1 = arith.constant 0 : i32
    return %c0_i32, %c0_i32_0 : i32, i32
  }
  func.func @transform_2(%arg0: i32) -> (i32, i32) {
    %c0_i32 = arith.constant 0 : i32
    %c0_i32_0 = arith.constant 0 : i32
    %c0_i32_1 = arith.constant 0 : i32
    return %c0_i32, %c0_i32_0 : i32, i32
  }
  func.func @transform_3(%arg0: i32) -> (i32, i32) {
    %c0_i32 = arith.constant 0 : i32
    %c0_i32_0 = arith.constant 0 : i32
    %c0_i32_1 = arith.constant 0 : i32
    return %c0_i32, %c0_i32_0 : i32, i32
  }
  func.func @transform_4(%arg0: i32) -> (i32, i32) {
    %c0_i32 = arith.constant 0 : i32
    %c0_i32_0 = arith.constant 0 : i32
    %c0_i32_1 = arith.constant 0 : i32
    return %c0_i32, %c0_i32_0 : i32, i32
  }
  func.func @transform_5(%arg0: i32) -> (i32, i32) {
    %c0_i32 = arith.constant 0 : i32
    %c0_i32_0 = arith.constant 0 : i32
    %c0_i32_1 = arith.constant 0 : i32
    return %c0_i32, %c0_i32_0 : i32, i32
  }
  func.func @transform_6(%arg0: i32) -> (i32, i32) {
    %c0_i32 = arith.constant 0 : i32
    %c0_i32_0 = arith.constant 0 : i32
    %c0_i32_1 = arith.constant 0 : i32
    return %c0_i32, %c0_i32_0 : i32, i32
  }
  func.func @transform_7(%arg0: i32) -> (i32, i32, i32) {
    %c0_i32 = arith.constant 0 : i32
    %c0_i32_0 = arith.constant 0 : i32
    %c0_i32_1 = arith.constant 0 : i32
    return %arg0, %c0_i32, %c0_i32_0 : i32, i32, i32
  }
}

</mosaic_0001>

<llo_original>
// kernel: seg_r_forward.1
$region0: #{seg_r_forward.1}
  #allocation0 [shape = 'u32[]', space=smem, size = 0x4, offset = 0x4, fixed_abs, tag = 'smem constant byte address 0x4 - core index']
  #allocation1 [shape = 'u32[144,128]{1,0:T(1,128)}', space=vmem, size = 0x12000, scoped, tag = 'internal scratch']
  %s0 = inlined_call_operand.vmem [shape: bf16[2,33,160], index: 0, kind: input, shape index: {}]
  %s1 = inlined_call_operand.vmem [shape: bf16[64,33], index: 1, kind: input, shape index: {}]
  %s2 = inlined_call_operand.vmem [shape: bf16[64,8], index: 2, kind: input, shape index: {}]
  %s3 = inlined_call_operand.vmem [shape: bf16[16,16], index: 3, kind: input, shape index: {}]
  %s4 = inlined_call_operand.vmem [shape: f32[8,10], index: 4, kind: input, shape index: {}]
  %s5 = inlined_call_operand.vmem [shape: bf16[128,196], index: 5, kind: input, shape index: {}]
  %s6 = inlined_call_operand.vmem [shape: bf16[32,196], index: 6, kind: input, shape index: {}]
  %s7 = inlined_call_operand.vmem [shape: f32[2,8,512], index: 7, kind: output, shape index: {}]
  %s8 = sld [smem:[#allocation0]]
  $region61: #{seg_r_forward.1} parent=0
    _
  %s10 = ssub.s32 1, %s8
  %s11 = scalar_select 0, %s10, %s8
  loop: start=0, step=1, limit=4
  $region2: #{seg_r_forward.1} parent=0 // loop_pre_header
    _
  $region3: #{seg_r_forward.1} parent=0 // loop_header
    %s13 = sphi 0, %s17
    %p14 = scmp.ge.s32.totalorder %s13, 4
    %s23 = sphi 0, %s25
    %s26 = sphi 0, %s23
    %s27 = sphi 0, %s26
    %s43 = sphi 0, %s27
    %s47 = sphi 0, %s47
    %s49 = sphi 0, %s47
    %s50 = sphi 0, %s49
    %s64 = sphi 0, %s50
    %s68 = sphi 0, %s68
    %s70 = sphi 0, %s68
    %s71 = sphi 0, %s70
    %s85 = sphi 0, %s71
    %s89 = sphi 0, %s89
    %s91 = sphi 0, %s89
    %s92 = sphi 0, %s91
    %s106 = sphi 0, %s92
    %s110 = sphi 0, %s110
    %s112 = sphi 0, %s110
    %s113 = sphi 0, %s112
    %s127 = sphi 0, %s113
    %s131 = sphi 0, %s131
    %s133 = sphi 0, %s131
    %s134 = sphi 0, %s133
    %s148 = sphi 0, %s134
    %s152 = sphi 0, %s152
    %s154 = sphi 0, %s152
    %s155 = sphi 0, %s154
    %s169 = sphi 0, %s155
    %s175 = sphi 0, %s177
    %s178 = sphi 0, %s175
    %s179 = sphi 0, %s178
    %s195 = sphi 0, %s179
  $region4: #{seg_r_forward.1} parent=0 // loop_header_branch
    %16 = sbr.rel (%p14) target = $region8
  $region5: #{seg_r_forward.1} parent=0 // loop_body
    %s18 = ssub.s32 %s13, 1
    %s19 = ssub.s32 %s13, 2
    %s20 = sadd.s32 %s13, 1
    %s21 = ssub.s32 %s13, %s20
    %p22 = scmp.eq.s32.totalorder %s21, 0
    %s24 = sadd.s32 %s23, 1
    %s25 = scalar_select %p22, %s23, %s24
    %p28 = pneg %p22
    %p29 = scmp.eq.s32.totalorder %s13, 1
    %p30 = por %p28, %p29
    %p31 = scmp.ne.s32.totalorder %s23, %s26
    %p32 = scmp.eq.s32.totalorder %s13, 0
    %p33 = por %p31, %p32
    %p34 = scmp.ne.s32.totalorder %s23, %s26
    %p35 = scmp.eq.s32.totalorder %s18, 1
    %p36 = por %p34, %p35
    %p37 = scmp.ne.s32.totalorder %s26, %s27
    %p38 = scmp.eq.s32.totalorder %s18, 0
    %p39 = por %p37, %p38
    %p40 = scmp.ne.s32.totalorder %s26, %s27
    %p41 = scmp.eq.s32.totalorder %s19, 1
    %p42 = por %p40, %p41
    %p44 = scmp.ne.s32.totalorder %s27, %s43
    %p45 = scmp.eq.s32.totalorder %s19, 0
    %p46 = por %p44, %p45
    %s48 = sadd.s32 %s47, 1
    %p51 = scmp.eq.s32.totalorder %s13, 1
    %p52 = scmp.ne.s32.totalorder %s47, %s49
    %p53 = scmp.eq.s32.totalorder %s13, 0
    %p54 = por %p52, %p53
    %p55 = scmp.ne.s32.totalorder %s47, %s49
    %p56 = scmp.eq.s32.totalorder %s18, 1
    %p57 = por %p55, %p56
    %p58 = scmp.ne.s32.totalorder %s49, %s50
    %p59 = scmp.eq.s32.totalorder %s18, 0
    %p60 = por %p58, %p59
    %p61 = scmp.ne.s32.totalorder %s49, %s50
    %p62 = scmp.eq.s32.totalorder %s19, 1
    %p63 = por %p61, %p62
    %p65 = scmp.ne.s32.totalorder %s50, %s64
    %p66 = scmp.eq.s32.totalorder %s19, 0
    %p67 = por %p65, %p66
    %s69 = sadd.s32 %s68, 1
    %p72 = scmp.eq.s32.totalorder %s13, 1
    %p73 = scmp.ne.s32.totalorder %s68, %s70
    %p74 = scmp.eq.s32.totalorder %s13, 0
    %p75 = por %p73, %p74
    %p76 = scmp.ne.s32.totalorder %s68, %s70
    %p77 = scmp.eq.s32.totalorder %s18, 1
    %p78 = por %p76, %p77
    %p79 = scmp.ne.s32.totalorder %s70, %s71
    %p80 = scmp.eq.s32.totalorder %s18, 0
    %p81 = por %p79, %p80
    %p82 = scmp.ne.s32.totalorder %s70, %s71
    %p83 = scmp.eq.s32.totalorder %s19, 1
    %p84 = por %p82, %p83
    %p86 = scmp.ne.s32.totalorder %s71, %s85
    %p87 = scmp.eq.s32.totalorder %s19, 0
    %p88 = por %p86, %p87
    %s90 = sadd.s32 %s89, 1
    %p93 = scmp.eq.s32.totalorder %s13, 1
    %p94 = scmp.ne.s32.totalorder %s89, %s91
    %p95 = scmp.eq.s32.totalorder %s13, 0
    %p96 = por %p94, %p95
    %p97 = scmp.ne.s32.totalorder %s89, %s91
    %p98 = scmp.eq.s32.totalorder %s18, 1
    %p99 = por %p97, %p98
    %p100 = scmp.ne.s32.totalorder %s91, %s92
    %p101 = scmp.eq.s32.totalorder %s18, 0
    %p102 = por %p100, %p101
    %p103 = scmp.ne.s32.totalorder %s91, %s92
    %p104 = scmp.eq.s32.totalorder %s19, 1
    %p105 = por %p103, %p104
    %p107 = scmp.ne.s32.totalorder %s92, %s106
    %p108 = scmp.eq.s32.totalorder %s19, 0
    %p109 = por %p107, %p108
    %s111 = sadd.s32 %s110, 1
    %p114 = scmp.eq.s32.totalorder %s13, 1
    %p115 = scmp.ne.s32.totalorder %s110, %s112
    %p116 = scmp.eq.s32.totalorder %s13, 0
    %p117 = por %p115, %p116
    %p118 = scmp.ne.s32.totalorder %s110, %s112
    %p119 = scmp.eq.s32.totalorder %s18, 1
    %p120 = por %p118, %p119
    %p121 = scmp.ne.s32.totalorder %s112, %s113
    %p122 = scmp.eq.s32.totalorder %s18, 0
    %p123 = por %p121, %p122
    %p124 = scmp.ne.s32.totalorder %s112, %s113
    %p125 = scmp.eq.s32.totalorder %s19, 1
    %p126 = por %p124, %p125
    %p128 = scmp.ne.s32.totalorder %s113, %s127
    %p129 = scmp.eq.s32.totalorder %s19, 0
    %p130 = por %p128, %p129
    %s132 = sadd.s32 %s131, 1
    %p135 = scmp.eq.s32.totalorder %s13, 1
    %p136 = scmp.ne.s32.totalorder %s131, %s133
    %p137 = scmp.eq.s32.totalorder %s13, 0
    %p138 = por %p136, %p137
    %p139 = scmp.ne.s32.totalorder %s131, %s133
    %p140 = scmp.eq.s32.totalorder %s18, 1
    %p141 = por %p139, %p140
    %p142 = scmp.ne.s32.totalorder %s133, %s134
    %p143 = scmp.eq.s32.totalorder %s18, 0
    %p144 = por %p142, %p143
    %p145 = scmp.ne.s32.totalorder %s133, %s134
    %p146 = scmp.eq.s32.totalorder %s19, 1
    %p147 = por %p145, %p146
    %p149 = scmp.ne.s32.totalorder %s134, %s148
    %p150 = scmp.eq.s32.totalorder %s19, 0
    %p151 = por %p149, %p150
    %s153 = sadd.s32 %s152, 1
    %p156 = scmp.eq.s32.totalorder %s13, 1
    %p157 = scmp.ne.s32.totalorder %s152, %s154
    %p158 = scmp.eq.s32.totalorder %s13, 0
    %p159 = por %p157, %p158
    %p160 = scmp.ne.s32.totalorder %s152, %s154
    %p161 = scmp.eq.s32.totalorder %s18, 1
    %p162 = por %p160, %p161
    %p163 = scmp.ne.s32.totalorder %s154, %s155
    %p164 = scmp.eq.s32.totalorder %s18, 0
    %p165 = por %p163, %p164
    %p166 = scmp.ne.s32.totalorder %s154, %s155
    %p167 = scmp.eq.s32.totalorder %s19, 1
    %p168 = por %p166, %p167
    %p170 = scmp.ne.s32.totalorder %s155, %s169
    %p171 = scmp.eq.s32.totalorder %s19, 0
    %p172 = por %p170, %p171
    %s173 = ssub.s32 %s13, %s20
    %p174 = scmp.eq.s32.totalorder %s173, 0
    %s176 = sadd.s32 %s175, 1
    %s177 = scalar_select %p174, %s175, %s176
    %p180 = pneg %p174
    %p181 = scmp.eq.s32.totalorder %s13, 1
    %p182 = por %p180, %p181
    %p183 = scmp.ne.s32.totalorder %s175, %s178
    %p184 = scmp.eq.s32.totalorder %s13, 0
    %p185 = por %p183, %p184
    %p186 = scmp.ne.s32.totalorder %s175, %s178
    %p187 = scmp.eq.s32.totalorder %s18, 1
    %p188 = por %p186, %p187
    %p189 = scmp.ne.s32.totalorder %s178, %s179
    %p190 = scmp.eq.s32.totalorder %s18, 0
    %p191 = por %p189, %p190
    %p192 = scmp.ne.s32.totalorder %s178, %s179
    %p193 = scmp.eq.s32.totalorder %s19, 1
    %p194 = por %p192, %p193
    %p196 = scmp.ne.s32.totalorder %s179, %s195
    %p197 = scmp.eq.s32.totalorder %s19, 0
    %p198 = por %p196, %p197
    %p199 = scmp.le.s32.totalorder 1, %s13
    %p200 = scmp.lt.s32.totalorder %s13, 3
    %p201 = pnand %p199, %p200
    %p202 = pneg %p201
    // Predicated region
    $region9: #{seg_r_forward.1} parent=5 // pred_check
      _
    $region10: #{seg_r_forward.1} parent=5 // pred_check_branch
      %204 = sbr.rel (%p201) target = $region12
    $region11: #{seg_r_forward.1} parent=5 // pred_region
      %s205 = ssub.s32 %s13, 1
      // Predicated region
      $region13: #{seg_r_forward.1} parent=11 // pred_check
        %p206 = pneg %p60
      $region14: #{seg_r_forward.1} parent=11 // pred_check_branch
        %208 = sbr.rel (%p206) target = $region16
      $region15: #{seg_r_forward.1} parent=11 // pred_region
        _
      $region16: #{seg_r_forward.1} parent=11 // pred_fallthru
        _
      // Predicated region
      $region17: #{seg_r_forward.1} parent=11 // pred_check
        %p209 = pneg %p81
      $region18: #{seg_r_forward.1} parent=11 // pred_check_branch
        %211 = sbr.rel (%p209) target = $region20
      $region19: #{seg_r_forward.1} parent=11 // pred_region
        _
      $region20: #{seg_r_forward.1} parent=11 // pred_fallthru
        _
      // Predicated region
      $region21: #{seg_r_forward.1} parent=11 // pred_check
        %p212 = pneg %p102
      $region22: #{seg_r_forward.1} parent=11 // pred_check_branch
        %214 = sbr.rel (%p212) target = $region24
      $region23: #{seg_r_forward.1} parent=11 // pred_region
        _
      $region24: #{seg_r_forward.1} parent=11 // pred_fallthru
        _
      // Predicated region
      $region25: #{seg_r_forward.1} parent=11 // pred_check
        %p215 = pneg %p123
      $region26: #{seg_r_forward.1} parent=11 // pred_check_branch
        %217 = sbr.rel (%p215) target = $region28
      $region27: #{seg_r_forward.1} parent=11 // pred_region
        _
      $region28: #{seg_r_forward.1} parent=11 // pred_fallthru
        _
      // Predicated region
      $region29: #{seg_r_forward.1} parent=11 // pred_check
        %p218 = pneg %p144
      $region30: #{seg_r_forward.1} parent=11 // pred_check_branch
        %220 = sbr.rel (%p218) target = $region32
      $region31: #{seg_r_forward.1} parent=11 // pred_region
        _
      $region32: #{seg_r_forward.1} parent=11 // pred_fallthru
        _
      // Predicated region
      $region33: #{seg_r_forward.1} parent=11 // pred_check
        %p221 = pneg %p165
      $region34: #{seg_r_forward.1} parent=11 // pred_check_branch
        %223 = sbr.rel (%p221) target = $region36
      $region35: #{seg_r_forward.1} parent=11 // pred_region
        _
      $region36: #{seg_r_forward.1} parent=11 // pred_fallthru
        _
    $region12: #{seg_r_forward.1} parent=5 // pred_fallthru
      _
    %p224 = scmp.lt.s32.totalorder %s13, 2
    // Predicated region
    $region37: #{seg_r_forward.1} parent=5 // pred_check
      %p225 = pneg %p224
    $region38: #{seg_r_forward.1} parent=5 // pred_check_branch
      %227 = sbr.rel (%p225) target = $region40
    $region39: #{seg_r_forward.1} parent=5 // pred_region
      // Predicated region
      $region41: #{seg_r_forward.1} parent=39 // pred_check
        %p228 = pneg %p33
      $region42: #{seg_r_forward.1} parent=39 // pred_check_branch
        %230 = sbr.rel (%p228) target = $region44
      $region43: #{seg_r_forward.1} parent=39 // pred_region
        %p231 = scmp.lt.s32.totalorder %s13, 1
        %s232 = scalar_select %p231, %s13, 1
        %s233 = smul.addr %s232, 10
        %s234 = smul.addr %s233, 4
        %s235 = scalar_lea.vmem %s0, %s234
      $region44: #{seg_r_forward.1} parent=39 // pred_fallthru
        _
    $region40: #{seg_r_forward.1} parent=5 // pred_fallthru
      _
    %p236 = scmp.le.s32.totalorder 1, %s13
    %p237 = scmp.lt.s32.totalorder %s13, 3
    %p238 = pnand %p236, %p237
    %p239 = pneg %p238
    // Predicated region
    $region45: #{seg_r_forward.1} parent=5 // pred_check
      _
    $region46: #{seg_r_forward.1} parent=5 // pred_check_branch
      %241 = sbr.rel (%p238) target = $region48
    $region47: #{seg_r_forward.1} parent=5 // pred_region
      %s242 = ssub.s32 %s13, 1
      %p243 = scmp.lt.s32.totalorder %s18, 1
      %s244 = scalar_select %p243, %s18, 1
      %s245 = smul.addr %s244, 10
      %s246 = smul.addr %s245, 4
      %s247 = scalar_lea.vmem %s0, %s246
      %p248 = pneg %p39
      %p249 = pneg %p36
      %p250 = pneg %p60
      %p251 = pneg %p57
      %p252 = pneg %p81
      %p253 = pneg %p78
      %p254 = pneg %p102
      %p255 = pneg %p99
      %p256 = pneg %p123
      %p257 = pneg %p120
      %p258 = pneg %p144
      %p259 = pneg %p141
      %p260 = pneg %p165
      %p261 = pneg %p162
      %p262 = pneg %p191
      %p263 = pneg %p188
      %p264 = scmp.lt.s32.totalorder %s18, 1
      %s265 = scalar_select %p264, %s18, 1
      %s266 = smul.addr %s265, 4
      %s267 = smul.addr %s266, 8
      %s268 = scalar_lea.vmem %s7, %s267
      %p269 = scmp.lt.s32.totalorder %s18, 1
      %s270 = scalar_select %p269, %s18, 1
      %s271 = smul.addr %s270, 10
      %s272 = smul.addr %s271, 4
      %s273 = scalar_lea.vmem %s0, %s272
      %p274 = scmp.lt.s32.totalorder %s18, 1
      %s275 = scalar_select %p274, %s18, 1
      %s276 = smul.addr %s275, 4
      %s277 = smul.addr %s276, 8
      %s278 = scalar_lea.vmem %s7, %s277
      %v280 = vld [vmem:[%s273] sm:$0xff]
      %v281 = vld [vmem:[%s273 + $0x8] sm:$0xff]
      %v282 = vld [vmem:[%s273 + $0x10] sm:$0xff]
      %v283 = vld [vmem:[%s273 + $0x18] sm:$0xff]
      %v284 = vld [vmem:[%s273 + $0x20] sm:$0x11]
      %v285 = vld [vmem:[%s1] sm:$0xf]
      %v286 = vld [vmem:[%s1 + $0x4] sm:$0xf]
      %v287 = vld [vmem:[%s1 + $0x8] sm:$0xf]
      %v288 = vld [vmem:[%s1 + $0xc] sm:$0xf]
      %v289 = vld [vmem:[%s1 + $0x10] sm:$0xf]
      %v290 = vld [vmem:[%s1 + $0x14] sm:$0xf]
      %v291 = vld [vmem:[%s1 + $0x18] sm:$0xf]
      %v292 = vld [vmem:[%s1 + $0x1c] sm:$0xf]
      %v301 = vunpack.c.l.b16 %v285
      %v302 = vunpack.c.l.b16 %v286
      %v303 = vunpack.c.l.b16 %v287
      %v304 = vunpack.c.l.b16 %v288
      %v305 = vunpack.c.l.b16 %v289
      %v306 = vunpack.c.l.b16 %v290
      %v307 = vunpack.c.l.b16 %v291
      %v308 = vunpack.c.l.b16 %v292
      %v309 = vpack.c.b16 %v302, %v301
      %v310 = vpack.c.b16 %v304, %v303
      %v311 = vpack.c.b16 %v306, %v305
      %v312 = vpack.c.b16 %v308, %v307
      %v318 = vunpack.c.l.b16 %v280
      %v319 = vunpack.c.h.b16 %v280
      %v320 = vunpack.c.l.b16 %v281
      %v321 = vunpack.c.h.b16 %v281
      %v322 = vunpack.c.l.b16 %v282
      %v323 = vunpack.c.h.b16 %v282
      %v324 = vunpack.c.l.b16 %v283
      %v325 = vunpack.c.h.b16 %v283
      %v326 = vunpack.c.l.b16 %v284
      %v327 = vunpack.c.h.b16 %v284
      %v328 = vpack.c.b16 %v320, %v318
      %v329 = vpack.c.b16 %v321, %v319
      %v330 = vpack.c.b16 %v324, %v322
      %v331 = vpack.c.b16 %v325, %v323
      %v332 = vpack.c.b16 %v326, %v326
      %v333 = vpack.c.b16 %v327, %v327
      %vm338 = vcmask 269312
      %v340 = vsel %vm338, %v309, 0
      %v343 = vsel %vm338, %v310, 0
      %v346 = vsel %vm338, %v311, 0
      %v349 = vsel %vm338, %v312, 0
      %vm351 = vcmask 1040384
      %v352 = vsel 0, 4294967295, 65535
      %v353 = vsel %vm351, %v352, 0
      %v355 = vand.u32 %v332, %v353
      %v358 = vand.u32 %v333, %v353
      %360 = vmatprep.subr.bf16.mxu0 0
      %361 = vmatpush1.bf16.msra.mxu0 0
      %362 = vmatprep.subr.bf16.mxu0 0
      %363 = vmatpush1.bf16.msra.mxu0 0
      %364 = vmatprep.subr.bf16.mxu0 0
      %365 = vmatpush1.bf16.msra.mxu0 0
      %366 = vmatprep.subr.bf16.mxu0 0
      %367 = vmatpush1.bf16.msra.mxu0 0
      %368 = vmatprep.subr.bf16.mxu0 0
      %369 = vmatpush1.bf16.msra.mxu0 0
      %370 = vmatprep.subr.bf16.mxu0 %v358
      %371 = vmatpush1.bf16.msra.mxu0 %v355
      %372 = vmatprep.subr.bf16.mxu0 %v331
      %373 = vmatpush1.bf16.msra.mxu0 %v330
      %374 = vmatprep.subr.bf16.mxu0 %v329
      %375 = vmatpush1.bf16.msra.mxu0 %v328
      %376 = vmatprep.subr.bf16.mxu0 0
      %377 = vmatpush2.bf16.msra.mxu0 0
      %378 = vmatprep.subr.bf16.mxu0 0
      %379 = vmatpush2.bf16.msra.mxu0 0
      %380 = vmatprep.subr.bf16.mxu0 0
      %381 = vmatpush2.bf16.msra.mxu0 0
      %382 = vmatprep.subr.bf16.mxu0 0
      %383 = vmatpush2.bf16.msra.mxu0 0
      %384 = vmatprep.subr.bf16.mxu0 0
      %385 = vmatpush2.bf16.msra.mxu0 0
      %386 = vmatprep.subr.bf16.mxu0 0
      %387 = vmatpush2.bf16.msra.mxu0 0
      %388 = vmatprep.subr.bf16.mxu0 0
      %389 = vmatpush2.bf16.msra.mxu0 0
      %390 = vmatprep.subr.bf16.mxu0 0
      %391 = vmatpush2.bf16.msra.mxu0 0
      %392 = vmatprep.mubr.bf16.mxu0 0
      %393 = vmatmul.mubr.bf16.gmra.mxu0 %v340
      %v394 = vpop.f32.mrf.mxu0
      %v395 = vadd.f32 0.0, %v394
      %v396 = vpop.f32.mrf.mxu0
      %v397 = vpop.f32.mrf.mxu0
      %v398 = vadd.f32 0.0, %v397
      %v399 = vpop.f32.mrf.mxu0
      %400 = vmatprep.mubr.bf16.mxu0 0
      %401 = vmatmul.mubr.bf16.gmra.mxu0 %v343
      %v402 = vpop.f32.mrf.mxu0
      %v403 = vadd.f32 0.0, %v402
      %v404 = vpop.f32.mrf.mxu0
      %v405 = vpop.f32.mrf.mxu0
      %v406 = vadd.f32 0.0, %v405
      %v407 = vpop.f32.mrf.mxu0
      %408 = vmatprep.mubr.bf16.mxu0 0
      %409 = vmatmul.mubr.bf16.gmra.mxu0 %v346
      %v410 = vpop.f32.mrf.mxu0
      %v411 = vadd.f32 0.0, %v410
      %v412 = vpop.f32.mrf.mxu0
      %v413 = vadd.f32 0.0, %v412
      %v414 = vpop.f32.mrf.mxu0
      %v415 = vadd.f32 0.0, %v414
      %v416 = vpop.f32.mrf.mxu0
      %v417 = vadd.f32 0.0, %v416
      %418 = vmatprep.mubr.bf16.mxu0 0
      %419 = vmatmul.mubr.bf16.gmra.mxu0 %v349
      %v420 = vpop.f32.mrf.mxu0
      %v421 = vpop.f32.mrf.mxu0
      %v422 = vadd.f32 0.0, %v421
      %v423 = vpop.f32.mrf.mxu0
      %v424 = vpop.f32.mrf.mxu0
      %v425 = vadd.f32 0.0, %v424
      %426 = vdwg.mxu0
      %v427 = vld [vmem:[%s2] sm:$0xf]
      %v428 = vld [vmem:[%s2 + $0x4] sm:$0xf]
      %v429 = vld [vmem:[%s2 + $0x8] sm:$0xf]
      %v430 = vld [vmem:[%s2 + $0xc] sm:$0xf]
      %v431 = vld [vmem:[%s2 + $0x10] sm:$0xf]
      %v432 = vld [vmem:[%s2 + $0x14] sm:$0xf]
      %v433 = vld [vmem:[%s2 + $0x18] sm:$0xf]
      %v434 = vld [vmem:[%s2 + $0x1c] sm:$0xf]
      %v435 = vld [vmem:[%s3] sm:$0xf]
      %v436 = vld [vmem:[%s3 + $0x4] sm:$0xf]
      %v437 = vld [vmem:[%s4] sm:$0xff]
      %v438 = vpack.c.bf16 %v395, %v395
      %v439 = vpack.c.bf16 %v398, %v398
      %vm440 = vcmask 523264
      %v442 = vsel %vm440, %v438, 0
      %v445 = vsel %vm440, %v439, 0
      %447 = vmatprep.subr.bf16.mxu0 0
      %448 = vmatpush1.bf16.xpose.msra.mxu0 0
      %449 = vmatprep.subr.bf16.mxu0 0
      %450 = vmatpush1.bf16.xpose.msra.mxu0 0
      %451 = vmatprep.subr.bf16.mxu0 0
      %452 = vmatpush1.bf16.xpose.msra.mxu0 0
      %453 = vmatprep.subr.bf16.mxu0 0
      %454 = vmatpush1.bf16.xpose.msra.mxu0 0
      %455 = vmatprep.subr.bf16.mxu0 0
      %456 = vmatpush1.bf16.xpose.msra.mxu0 0
      %457 = vmatprep.subr.bf16.mxu0 0
      %458 = vmatpush1.bf16.xpose.msra.mxu0 0
      %459 = vmatprep.subr.bf16.mxu0 0
      %460 = vmatpush1.bf16.xpose.msra.mxu0 0
      %461 = vmatprep.subr.bf16.mxu0 0
      %462 = vmatpush1.bf16.xpose.msra.mxu0 %v445
      %463 = vmatprep.subr.bf16.mxu0 0
      %464 = vmatpush2.bf16.xpose.msra.mxu0 0
      %465 = vmatprep.subr.bf16.mxu0 0
      %466 = vmatpush2.bf16.xpose.msra.mxu0 0
      %467 = vmatprep.subr.bf16.mxu0 0
      %468 = vmatpush2.bf16.xpose.msra.mxu0 0
      %469 = vmatprep.subr.bf16.mxu0 0
      %470 = vmatpush2.bf16.xpose.msra.mxu0 0
      %471 = vmatprep.subr.bf16.mxu0 0
      %472 = vmatpush2.bf16.xpose.msra.mxu0 0
      %473 = vmatprep.subr.bf16.mxu0 0
      %474 = vmatpush2.bf16.xpose.msra.mxu0 0
      %475 = vmatprep.subr.bf16.mxu0 0
      %476 = vmatpush2.bf16.xpose.msra.mxu0 0
      %477 = vmatprep.subr.bf16.mxu0 0
      %478 = vmatpush2.bf16.xpose.msra.mxu0 0
      %479 = vmatprep.mubr.bf16.mxu0 0
      %480 = vmatmul.mubr.bf16.gmra.mxu0 %v442
      %v481 = vpop.f32.mrf.mxu0
      %v482 = vadd.f32 0.0, %v481
      %v483 = vpop.f32.mrf.mxu0
      %v484 = vpop.f32.mrf.mxu0
      %v485 = vpop.f32.mrf.mxu0
      %486 = vdwg.mxu0
      %v487 = vpack.c.bf16 %v411, %v411
      %v488 = vpack.c.bf16 %v413, %v413
      %v489 = vpack.c.bf16 %v415, %v415
      %v490 = vpack.c.bf16 %v417, %v417
      %493 = vrot.lane.b32.xlu0 %v487, 48
      %v494 = vpop.permute.xlu0 %493
      %495 = vrot.lane.b32.xlu0 %v488, 48
      %v496 = vpop.permute.xlu0 %495
      %vm497 = vcmask 392192
      %v498 = vsel %vm497, %v494, %v496
      %501 = vrot.lane.b32.xlu0 %v489, 48
      %v502 = vpop.permute.xlu0 %501
      %503 = vrot.lane.b32.xlu0 %v490, 48
      %v504 = vpop.permute.xlu0 %503
      %v505 = vsel %vm497, %v502, %v504
      %v507 = vsel %vm440, %v498, 0
      %v510 = vsel %vm440, %v505, 0
      %512 = vmatprep.subr.bf16.mxu0 0
      %513 = vmatpush1.bf16.xpose.msra.mxu0 0
      %514 = vmatprep.subr.bf16.mxu0 0
      %515 = vmatpush1.bf16.xpose.msra.mxu0 0
      %516 = vmatprep.subr.bf16.mxu0 0
      %517 = vmatpush1.bf16.xpose.msra.mxu0 0
      %518 = vmatprep.subr.bf16.mxu0 0
      %519 = vmatpush1.bf16.xpose.msra.mxu0 0
      %520 = vmatprep.subr.bf16.mxu0 0
      %521 = vmatpush1.bf16.xpose.msra.mxu0 0
      %522 = vmatprep.subr.bf16.mxu0 0
      %523 = vmatpush1.bf16.xpose.msra.mxu0 0
      %524 = vmatprep.subr.bf16.mxu0 0
      %525 = vmatpush1.bf16.xpose.msra.mxu0 0
      %526 = vmatprep.subr.bf16.mxu0 0
      %527 = vmatpush1.bf16.xpose.msra.mxu0 %v510
      %528 = vmatprep.subr.bf16.mxu0 0
      %529 = vmatpush2.bf16.xpose.msra.mxu0 0
      %530 = vmatprep.subr.bf16.mxu0 0
      %531 = vmatpush2.bf16.xpose.msra.mxu0 0
      %532 = vmatprep.subr.bf16.mxu0 0
      %533 = vmatpush2.bf16.xpose.msra.mxu0 0
      %534 = vmatprep.subr.bf16.mxu0 0
      %535 = vmatpush2.bf16.xpose.msra.mxu0 0
      %536 = vmatprep.subr.bf16.mxu0 0
      %537 = vmatpush2.bf16.xpose.msra.mxu0 0
      %538 = vmatprep.subr.bf16.mxu0 0
      %539 = vmatpush2.bf16.xpose.msra.mxu0 0
      %540 = vmatprep.subr.bf16.mxu0 0
      %541 = vmatpush2.bf16.xpose.msra.mxu0 0
      %542 = vmatprep.subr.bf16.mxu0 0
      %543 = vmatpush2.bf16.xpose.msra.mxu0 0
      %544 = vmatprep.mubr.bf16.mxu0 0
      %545 = vmatmul.mubr.bf16.gmra.mxu0 %v507
      %v546 = vpop.f32.mrf.mxu0
      %v547 = vadd.f32 0.0, %v546
      %v548 = vpop.f32.mrf.mxu0
      %v549 = vpop.f32.mrf.mxu0
      %v550 = vpop.f32.mrf.mxu0
      %551 = vdwg.mxu0
      %v552 = vpack.c.bf16 %v482, %v482
      %vm553 = vcmask 64512
      %v555 = vsel %vm553, %v552, 0
      %vm557 = vcmask 1043456
      %v558 = vsel %vm557, %v505, 0
      %560 = vmatprep.subr.bf16.mxu0 0
      %561 = vmatpush1.bf16.msra.mxu0 0
      %562 = vmatprep.subr.bf16.mxu0 0
      %563 = vmatpush1.bf16.msra.mxu0 0
      %564 = vmatprep.subr.bf16.mxu0 0
      %565 = vmatpush1.bf16.msra.mxu0 0
      %566 = vmatprep.subr.bf16.mxu0 0
      %567 = vmatpush1.bf16.msra.mxu0 0
      %568 = vmatprep.subr.bf16.mxu0 0
      %569 = vmatpush1.bf16.msra.mxu0 0
      %570 = vmatprep.subr.bf16.mxu0 0
      %571 = vmatpush1.bf16.msra.mxu0 0
      %572 = vmatprep.subr.bf16.mxu0 0
      %573 = vmatpush1.bf16.msra.mxu0 0
      %574 = vmatprep.subr.bf16.mxu0 0
      %575 = vmatpush1.bf16.msra.mxu0 %v558
      %576 = vmatprep.subr.bf16.mxu0 0
      %577 = vmatpush2.bf16.msra.mxu0 0
      %578 = vmatprep.subr.bf16.mxu0 0
      %579 = vmatpush2.bf16.msra.mxu0 0
      %580 = vmatprep.subr.bf16.mxu0 0
      %581 = vmatpush2.bf16.msra.mxu0 0
      %582 = vmatprep.subr.bf16.mxu0 0
      %583 = vmatpush2.bf16.msra.mxu0 0
      %584 = vmatprep.subr.bf16.mxu0 0
      %585 = vmatpush2.bf16.msra.mxu0 0
      %586 = vmatprep.subr.bf16.mxu0 0
      %587 = vmatpush2.bf16.msra.mxu0 0
      %588 = vmatprep.subr.bf16.mxu0 0
      %589 = vmatpush2.bf16.msra.mxu0 0
      %590 = vmatprep.subr.bf16.mxu0 0
      %591 = vmatpush2.bf16.msra.mxu0 0
      %592 = vmatprep.mubr.bf16.mxu0 0
      %593 = vmatmul.mubr.bf16.gmra.mxu0 %v555
      %v594 = vpop.f32.mrf.mxu0
      %v595 = vadd.f32 0.0, %v594
      %v596 = vpop.f32.mrf.mxu0
      %v597 = vpop.f32.mrf.mxu0
      %v598 = vpop.f32.mrf.mxu0
      %599 = vdwg.mxu0
      %v600 = vmul.f32 %v595, 0.015625
      %v601 = vpack.c.bf16 %v547, %v547
      %v603 = vsel %vm553, %v601, 0
      %v605 = vsel %vm557, %v439, 0
      %607 = vmatprep.subr.bf16.mxu0 0
      %608 = vmatpush1.bf16.msra.mxu0 0
      %609 = vmatprep.subr.bf16.mxu0 0
      %610 = vmatpush1.bf16.msra.mxu0 0
      %611 = vmatprep.subr.bf16.mxu0 0
      %612 = vmatpush1.bf16.msra.mxu0 0
      %613 = vmatprep.subr.bf16.mxu0 0
      %614 = vmatpush1.bf16.msra.mxu0 0
      %615 = vmatprep.subr.bf16.mxu0 0
      %616 = vmatpush1.bf16.msra.mxu0 0
      %617 = vmatprep.subr.bf16.mxu0 0
      %618 = vmatpush1.bf16.msra.mxu0 0
      %619 = vmatprep.subr.bf16.mxu0 0
      %620 = vmatpush1.bf16.msra.mxu0 0
      %621 = vmatprep.subr.bf16.mxu0 0
      %622 = vmatpush1.bf16.msra.mxu0 %v605
      %623 = vmatprep.subr.bf16.mxu0 0
      %624 = vmatpush2.bf16.msra.mxu0 0
      %625 = vmatprep.subr.bf16.mxu0 0
      %626 = vmatpush2.bf16.msra.mxu0 0
      %627 = vmatprep.subr.bf16.mxu0 0
      %628 = vmatpush2.bf16.msra.mxu0 0
      %629 = vmatprep.subr.bf16.mxu0 0
      %630 = vmatpush2.bf16.msra.mxu0 0
      %631 = vmatprep.subr.bf16.mxu0 0
      %632 = vmatpush2.bf16.msra.mxu0 0
      %633 = vmatprep.subr.bf16.mxu0 0
      %634 = vmatpush2.bf16.msra.mxu0 0
      %635 = vmatprep.subr.bf16.mxu0 0
      %636 = vmatpush2.bf16.msra.mxu0 0
      %637 = vmatprep.subr.bf16.mxu0 0
      %638 = vmatpush2.bf16.msra.mxu0 0
      %639 = vmatprep.mubr.bf16.mxu0 0
      %640 = vmatmul.mubr.bf16.gmra.mxu0 %v603
      %v641 = vpop.f32.mrf.mxu0
      %v642 = vadd.f32 0.0, %v641
      %v643 = vpop.f32.mrf.mxu0
      %v644 = vpop.f32.mrf.mxu0
      %v645 = vpop.f32.mrf.mxu0
      %646 = vdwg.mxu0
      %v647 = vmul.f32 %v642, 0.015625
      %v648 = vpack.c.bf16 %v600, %v600
      %650 = vset.pattern.permute.xlu0 0
      %651 = vperm.xlu0 %650, %v437
      %v652 = vpop.permute.xlu0 %651
      %v655 = vsel %vm553, %v427, 0
      %v658 = vsel %vm557, %v648, 0
      %660 = vmatprep.subr.bf16.mxu0 0
      %661 = vmatpush1.bf16.msra.mxu0 0
      %662 = vmatprep.subr.bf16.mxu0 0
      %663 = vmatpush1.bf16.msra.mxu0 0
      %664 = vmatprep.subr.bf16.mxu0 0
      %665 = vmatpush1.bf16.msra.mxu0 0
      %666 = vmatprep.subr.bf16.mxu0 0
      %667 = vmatpush1.bf16.msra.mxu0 0
      %668 = vmatprep.subr.bf16.mxu0 0
      %669 = vmatpush1.bf16.msra.mxu0 0
      %670 = vmatprep.subr.bf16.mxu0 0
      %671 = vmatpush1.bf16.msra.mxu0 0
      %672 = vmatprep.subr.bf16.mxu0 0
      %673 = vmatpush1.bf16.msra.mxu0 0
      %674 = vmatprep.subr.bf16.mxu0 0
      %675 = vmatpush1.bf16.msra.mxu0 %v658
      %676 = vmatprep.subr.bf16.mxu0 0
      %677 = vmatpush2.bf16.msra.mxu0 0
      %678 = vmatprep.subr.bf16.mxu0 0
      %679 = vmatpush2.bf16.msra.mxu0 0
      %680 = vmatprep.subr.bf16.mxu0 0
      %681 = vmatpush2.bf16.msra.mxu0 0
      %682 = vmatprep.subr.bf16.mxu0 0
      %683 = vmatpush2.bf16.msra.mxu0 0
      %684 = vmatprep.subr.bf16.mxu0 0
      %685 = vmatpush2.bf16.msra.mxu0 0
      %686 = vmatprep.subr.bf16.mxu0 0
      %687 = vmatpush2.bf16.msra.mxu0 0
      %688 = vmatprep.subr.bf16.mxu0 0
      %689 = vmatpush2.bf16.msra.mxu0 0
      %690 = vmatprep.subr.bf16.mxu0 0
      %691 = vmatpush2.bf16.msra.mxu0 0
      %692 = vmatprep.mubr.bf16.mxu0 0
      %693 = vmatmul.mubr.bf16.gmra.mxu0 %v655
      %v694 = vpop.f32.mrf.mxu0
      %v695 = vadd.f32 %v652, %v694
      %v696 = vpop.f32.mrf.mxu0
      %v697 = vpop.f32.mrf.mxu0
      %v698 = vpop.f32.mrf.mxu0
      %699 = vdwg.mxu0
      %702 = vrot.lane.b32.xlu0 %v411, 48
      %v703 = vpop.permute.xlu0 %702
      %704 = vrot.lane.b32.xlu0 %v413, 48
      %v705 = vpop.permute.xlu0 %704
      %vm706 = vcmask 392192
      %v707 = vsel %vm706, %v703, %v705
      %v709 = vadd.f32 %v695, %v707
      %v710 = vpack.c.bf16 %v647, %v647
      %711 = vset.pattern.permute.xlu0 1
      %712 = vperm.xlu0 %711, %v437
      %v713 = vpop.permute.xlu0 %712
      %v716 = vsel %vm553, %v428, 0
      %v719 = vsel %vm557, %v710, 0
      %721 = vmatprep.subr.bf16.mxu0 0
      %722 = vmatpush1.bf16.msra.mxu0 0
      %723 = vmatprep.subr.bf16.mxu0 0
      %724 = vmatpush1.bf16.msra.mxu0 0
      %725 = vmatprep.subr.bf16.mxu0 0
      %726 = vmatpush1.bf16.msra.mxu0 0
      %727 = vmatprep.subr.bf16.mxu0 0
      %728 = vmatpush1.bf16.msra.mxu0 0
      %729 = vmatprep.subr.bf16.mxu0 0
      %730 = vmatpush1.bf16.msra.mxu0 0
      %731 = vmatprep.subr.bf16.mxu0 0
      %732 = vmatpush1.bf16.msra.mxu0 0
      %733 = vmatprep.subr.bf16.mxu0 0
      %734 = vmatpush1.bf16.msra.mxu0 0
      %735 = vmatprep.subr.bf16.mxu0 0
      %736 = vmatpush1.bf16.msra.mxu0 %v719
      %737 = vmatprep.subr.bf16.mxu0 0
      %738 = vmatpush2.bf16.msra.mxu0 0
      %739 = vmatprep.subr.bf16.mxu0 0
      %740 = vmatpush2.bf16.msra.mxu0 0
      %741 = vmatprep.subr.bf16.mxu0 0
      %742 = vmatpush2.bf16.msra.mxu0 0
      %743 = vmatprep.subr.bf16.mxu0 0
      %744 = vmatpush2.bf16.msra.mxu0 0
      %745 = vmatprep.subr.bf16.mxu0 0
      %746 = vmatpush2.bf16.msra.mxu0 0
      %747 = vmatprep.subr.bf16.mxu0 0
      %748 = vmatpush2.bf16.msra.mxu0 0
      %749 = vmatprep.subr.bf16.mxu0 0
      %750 = vmatpush2.bf16.msra.mxu0 0
      %751 = vmatprep.subr.bf16.mxu0 0
      %752 = vmatpush2.bf16.msra.mxu0 0
      %753 = vmatprep.mubr.bf16.mxu0 0
      %754 = vmatmul.mubr.bf16.gmra.mxu0 %v716
      %v755 = vpop.f32.mrf.mxu0
      %v756 = vadd.f32 %v713, %v755
      %v757 = vpop.f32.mrf.mxu0
      %v758 = vpop.f32.mrf.mxu0
      %v759 = vpop.f32.mrf.mxu0
      %760 = vdwg.mxu0
      %v761 = vadd.f32 %v756, %v395
      %v762 = vsel %vm440, %v709, 0.0
      %763 = vadd.xlane.f32.xlu0 %v762
      %v764 = vpop.xlane.xlu0 %763
      %v765 = vmul.f32 %v764, 0.015625
      %v766 = vsel %vm440, %v709, -inf
      %767 = vmax.xlane.f32.xlu0 %v766
      %v768 = vpop.xlane.xlu0 %767
      %vm769 = vcmask 7168
      %v770 = vsel %vm769, %v765, %v768
      %v771 = vpack.c.bf16 %v770, %v770
      %772 = vset.pattern.permute.xlu0 2
      %773 = vperm.xlu0 %772, %v437
      %v774 = vpop.permute.xlu0 %773
      %v777 = vsel %vm553, %v429, 0
      %v780 = vsel %vm557, %v771, 0
      %782 = vmatprep.subr.bf16.mxu0 0
      %783 = vmatpush1.bf16.msra.mxu0 0
      %784 = vmatprep.subr.bf16.mxu0 0
      %785 = vmatpush1.bf16.msra.mxu0 0
      %786 = vmatprep.subr.bf16.mxu0 0
      %787 = vmatpush1.bf16.msra.mxu0 0
      %788 = vmatprep.subr.bf16.mxu0 0
      %789 = vmatpush1.bf16.msra.mxu0 0
      %790 = vmatprep.subr.bf16.mxu0 0
      %791 = vmatpush1.bf16.msra.mxu0 0
      %792 = vmatprep.subr.bf16.mxu0 0
      %793 = vmatpush1.bf16.msra.mxu0 0
      %794 = vmatprep.subr.bf16.mxu0 0
      %795 = vmatpush1.bf16.msra.mxu0 0
      %796 = vmatprep.subr.bf16.mxu0 0
      %797 = vmatpush1.bf16.msra.mxu0 %v780
      %798 = vmatprep.subr.bf16.mxu0 0
      %799 = vmatpush2.bf16.msra.mxu0 0
      %800 = vmatprep.subr.bf16.mxu0 0
      %801 = vmatpush2.bf16.msra.mxu0 0
      %802 = vmatprep.subr.bf16.mxu0 0
      %803 = vmatpush2.bf16.msra.mxu0 0
      %804 = vmatprep.subr.bf16.mxu0 0
      %805 = vmatpush2.bf16.msra.mxu0 0
      %806 = vmatprep.subr.bf16.mxu0 0
      %807 = vmatpush2.bf16.msra.mxu0 0
      %808 = vmatprep.subr.bf16.mxu0 0
      %809 = vmatpush2.bf16.msra.mxu0 0
      %810 = vmatprep.subr.bf16.mxu0 0
      %811 = vmatpush2.bf16.msra.mxu0 0
      %812 = vmatprep.subr.bf16.mxu0 0
      %813 = vmatpush2.bf16.msra.mxu0 0
      %814 = vmatprep.mubr.bf16.mxu0 0
      %815 = vmatmul.mubr.bf16.gmra.mxu0 %v777
      %v816 = vpop.f32.mrf.mxu0
      %v817 = vadd.f32 %v774, %v816
      %v818 = vpop.f32.mrf.mxu0
      %v819 = vpop.f32.mrf.mxu0
      %v820 = vpop.f32.mrf.mxu0
      %821 = vdwg.mxu0
      %v822 = vmax.f32 %v817, 0.0
      %v823 = vpack.c.bf16 %v822, %v822
      %824 = vset.pattern.permute.xlu0 3
      %825 = vperm.xlu0 %824, %v437
      %v826 = vpop.permute.xlu0 %825
      %v829 = vsel %vm553, %v430, 0
      %v832 = vsel %vm557, %v823, 0
      %834 = vmatprep.subr.bf16.mxu0 0
      %835 = vmatpush1.bf16.msra.mxu0 0
      %836 = vmatprep.subr.bf16.mxu0 0
      %837 = vmatpush1.bf16.msra.mxu0 0
      %838 = vmatprep.subr.bf16.mxu0 0
      %839 = vmatpush1.bf16.msra.mxu0 0
      %840 = vmatprep.subr.bf16.mxu0 0
      %841 = vmatpush1.bf16.msra.mxu0 0
      %842 = vmatprep.subr.bf16.mxu0 0
      %843 = vmatpush1.bf16.msra.mxu0 0
      %844 = vmatprep.subr.bf16.mxu0 0
      %845 = vmatpush1.bf16.msra.mxu0 0
      %846 = vmatprep.subr.bf16.mxu0 0
      %847 = vmatpush1.bf16.msra.mxu0 0
      %848 = vmatprep.subr.bf16.mxu0 0
      %849 = vmatpush1.bf16.msra.mxu0 %v832
      %850 = vmatprep.subr.bf16.mxu0 0
      %851 = vmatpush2.bf16.msra.mxu0 0
      %852 = vmatprep.subr.bf16.mxu0 0
      %853 = vmatpush2.bf16.msra.mxu0 0
      %854 = vmatprep.subr.bf16.mxu0 0
      %855 = vmatpush2.bf16.msra.mxu0 0
      %856 = vmatprep.subr.bf16.mxu0 0
      %857 = vmatpush2.bf16.msra.mxu0 0
      %858 = vmatprep.subr.bf16.mxu0 0
      %859 = vmatpush2.bf16.msra.mxu0 0
      %860 = vmatprep.subr.bf16.mxu0 0
      %861 = vmatpush2.bf16.msra.mxu0 0
      %862 = vmatprep.subr.bf16.mxu0 0
      %863 = vmatpush2.bf16.msra.mxu0 0
      %864 = vmatprep.subr.bf16.mxu0 0
      %865 = vmatpush2.bf16.msra.mxu0 0
      %866 = vmatprep.mubr.bf16.mxu0 0
      %867 = vmatmul.mubr.bf16.gmra.mxu0 %v829
      %v868 = vpop.f32.mrf.mxu0
      %v869 = vadd.f32 %v826, %v868
      %v870 = vpop.f32.mrf.mxu0
      %v871 = vpop.f32.mrf.mxu0
      %v872 = vpop.f32.mrf.mxu0
      %873 = vdwg.mxu0
      %875 = vrot.lane.b32.xlu0 %v869, 127
      %v876 = vpop.permute.xlu0 %875
      %v878 = vadd.f32 %v869, %v876
      %v879 = vxor.u32 %v878, 2147483648
      %v880 = vmul.f32 %v879, 1.442695
      %v881 = vpow.pop %v880
      %v882 = vadd.f32 %v881, 1.0
      %v883 = vrcp.pop %v882
      %v884 = vmul.f32 1.0, %v883
      %886 = vset.pattern.permute.xlu0 0
      %887 = vperm.xlu0 %886, %v884
      %v888 = vpop.permute.xlu0 %887
      %v890 = vmul.f32 %v761, %v888
      %v891 = vmul.f32 %v709, %v888
      %v892 = vpack.c.bf16 %v403, %v403
      %v893 = vpack.c.bf16 %v406, %v406
      %895 = vrot.lane.b32.xlu0 %v892, 64
      %v896 = vpop.permute.xlu0 %895
      %898 = vrot.lane.b32.xlu0 %v893, 64
      %v899 = vpop.permute.xlu0 %898
      %vm900 = vcmask 130048
      %v902 = vsel %vm900, %v896, 0
      %v905 = vsel %vm900, %v899, 0
      %907 = vmatprep.subr.bf16.mxu0 0
      %908 = vmatpush1.bf16.xpose.msra.mxu0 0
      %909 = vmatprep.subr.bf16.mxu0 0
      %910 = vmatpush1.bf16.xpose.msra.mxu0 0
      %911 = vmatprep.subr.bf16.mxu0 0
      %912 = vmatpush1.bf16.xpose.msra.mxu0 0
      %913 = vmatprep.subr.bf16.mxu0 0
      %914 = vmatpush1.bf16.xpose.msra.mxu0 0
      %915 = vmatprep.subr.bf16.mxu0 0
      %916 = vmatpush1.bf16.xpose.msra.mxu0 0
      %917 = vmatprep.subr.bf16.mxu0 0
      %918 = vmatpush1.bf16.xpose.msra.mxu0 0
      %919 = vmatprep.subr.bf16.mxu0 0
      %920 = vmatpush1.bf16.xpose.msra.mxu0 0
      %921 = vmatprep.subr.bf16.mxu0 0
      %922 = vmatpush1.bf16.xpose.msra.mxu0 %v905
      %923 = vmatprep.subr.bf16.mxu0 0
      %924 = vmatpush2.bf16.xpose.msra.mxu0 0
      %925 = vmatprep.subr.bf16.mxu0 0
      %926 = vmatpush2.bf16.xpose.msra.mxu0 0
      %927 = vmatprep.subr.bf16.mxu0 0
      %928 = vmatpush2.bf16.xpose.msra.mxu0 0
      %929 = vmatprep.subr.bf16.mxu0 0
      %930 = vmatpush2.bf16.xpose.msra.mxu0 0
      %931 = vmatprep.subr.bf16.mxu0 0
      %932 = vmatpush2.bf16.xpose.msra.mxu0 0
      %933 = vmatprep.subr.bf16.mxu0 0
      %934 = vmatpush2.bf16.xpose.msra.mxu0 0
      %935 = vmatprep.subr.bf16.mxu0 0
      %936 = vmatpush2.bf16.xpose.msra.mxu0 0
      %937 = vmatprep.subr.bf16.mxu0 0
      %938 = vmatpush2.bf16.xpose.msra.mxu0 0
      %939 = vmatprep.mubr.bf16.mxu0 0
      %940 = vmatmul.mubr.bf16.gmra.mxu0 %v902
      %v941 = vpop.f32.mrf.mxu0
      %v942 = vadd.f32 0.0, %v941
      %v943 = vpop.f32.mrf.mxu0
      %v944 = vpop.f32.mrf.mxu0
      %v945 = vpop.f32.mrf.mxu0
      %946 = vdwg.mxu0
      %v947 = vpack.c.bf16 %v422, %v422
      %v948 = vpack.c.bf16 %v425, %v425
      %950 = vrot.lane.b32.xlu0 %v947, 112
      %v951 = vpop.permute.xlu0 %950
      %953 = vrot.lane.b32.xlu0 %v948, 112
      %v954 = vpop.permute.xlu0 %953
      %v956 = vsel %vm900, %v951, 0
      %v959 = vsel %vm900, %v954, 0
      %961 = vmatprep.subr.bf16.mxu0 0
      %962 = vmatpush1.bf16.xpose.msra.mxu0 0
      %963 = vmatprep.subr.bf16.mxu0 0
      %964 = vmatpush1.bf16.xpose.msra.mxu0 0
      %965 = vmatprep.subr.bf16.mxu0 0
      %966 = vmatpush1.bf16.xpose.msra.mxu0 0
      %967 = vmatprep.subr.bf16.mxu0 0
      %968 = vmatpush1.bf16.xpose.msra.mxu0 0
      %969 = vmatprep.subr.bf16.mxu0 0
      %970 = vmatpush1.bf16.xpose.msra.mxu0 0
      %971 = vmatprep.subr.bf16.mxu0 0
      %972 = vmatpush1.bf16.xpose.msra.mxu0 0
      %973 = vmatprep.subr.bf16.mxu0 0
      %974 = vmatpush1.bf16.xpose.msra.mxu0 0
      %975 = vmatprep.subr.bf16.mxu0 0
      %976 = vmatpush1.bf16.xpose.msra.mxu0 %v959
      %977 = vmatprep.subr.bf16.mxu0 0
      %978 = vmatpush2.bf16.xpose.msra.mxu0 0
      %979 = vmatprep.subr.bf16.mxu0 0
      %980 = vmatpush2.bf16.xpose.msra.mxu0 0
      %981 = vmatprep.subr.bf16.mxu0 0
      %982 = vmatpush2.bf16.xpose.msra.mxu0 0
      %983 = vmatprep.subr.bf16.mxu0 0
      %984 = vmatpush2.bf16.xpose.msra.mxu0 0
      %985 = vmatprep.subr.bf16.mxu0 0
      %986 = vmatpush2.bf16.xpose.msra.mxu0 0
      %987 = vmatprep.subr.bf16.mxu0 0
      %988 = vmatpush2.bf16.xpose.msra.mxu0 0
      %989 = vmatprep.subr.bf16.mxu0 0
      %990 = vmatpush2.bf16.xpose.msra.mxu0 0
      %991 = vmatprep.subr.bf16.mxu0 0
      %992 = vmatpush2.bf16.xpose.msra.mxu0 0
      %993 = vmatprep.mubr.bf16.mxu0 0
      %994 = vmatmul.mubr.bf16.gmra.mxu0 %v956
      %v995 = vpop.f32.mrf.mxu0
      %v996 = vadd.f32 0.0, %v995
      %v997 = vpop.f32.mrf.mxu0
      %v998 = vpop.f32.mrf.mxu0
      %v999 = vpop.f32.mrf.mxu0
      %1000 = vdwg.mxu0
      %v1001 = vpack.c.bf16 %v942, %v942
      %v1003 = vsel %vm553, %v1001, 0
      %v1005 = vsel %vm557, %v954, 0
      %1007 = vmatprep.subr.bf16.mxu0 0
      %1008 = vmatpush1.bf16.msra.mxu0 0
      %1009 = vmatprep.subr.bf16.mxu0 0
      %1010 = vmatpush1.bf16.msra.mxu0 0
      %1011 = vmatprep.subr.bf16.mxu0 0
      %1012 = vmatpush1.bf16.msra.mxu0 0
      %1013 = vmatprep.subr.bf16.mxu0 0
      %1014 = vmatpush1.bf16.msra.mxu0 0
      %1015 = vmatprep.subr.bf16.mxu0 0
      %1016 = vmatpush1.bf16.msra.mxu0 0
      %1017 = vmatprep.subr.bf16.mxu0 0
      %1018 = vmatpush1.bf16.msra.mxu0 0
      %1019 = vmatprep.subr.bf16.mxu0 0
      %1020 = vmatpush1.bf16.msra.mxu0 0
      %1021 = vmatprep.subr.bf16.mxu0 0
      %1022 = vmatpush1.bf16.msra.mxu0 %v1005
      %1023 = vmatprep.subr.bf16.mxu0 0
      %1024 = vmatpush2.bf16.msra.mxu0 0
      %1025 = vmatprep.subr.bf16.mxu0 0
      %1026 = vmatpush2.bf16.msra.mxu0 0
      %1027 = vmatprep.subr.bf16.mxu0 0
      %1028 = vmatpush2.bf16.msra.mxu0 0
      %1029 = vmatprep.subr.bf16.mxu0 0
      %1030 = vmatpush2.bf16.msra.mxu0 0
      %1031 = vmatprep.subr.bf16.mxu0 0
      %1032 = vmatpush2.bf16.msra.mxu0 0
      %1033 = vmatprep.subr.bf16.mxu0 0
      %1034 = vmatpush2.bf16.msra.mxu0 0
      %1035 = vmatprep.subr.bf16.mxu0 0
      %1036 = vmatpush2.bf16.msra.mxu0 0
      %1037 = vmatprep.subr.bf16.mxu0 0
      %1038 = vmatpush2.bf16.msra.mxu0 0
      %1039 = vmatprep.mubr.bf16.mxu0 0
      %1040 = vmatmul.mubr.bf16.gmra.mxu0 %v1003
      %v1041 = vpop.f32.mrf.mxu0
      %v1042 = vadd.f32 0.0, %v1041
      %v1043 = vpop.f32.mrf.mxu0
      %v1044 = vpop.f32.mrf.mxu0
      %v1045 = vpop.f32.mrf.mxu0
      %1046 = vdwg.mxu0
      %v1047 = vmul.f32 %v1042, 0.0625
      %v1048 = vpack.c.bf16 %v996, %v996
      %v1050 = vsel %vm553, %v1048, 0
      %v1052 = vsel %vm557, %v899, 0
      %1054 = vmatprep.subr.bf16.mxu0 0
      %1055 = vmatpush1.bf16.msra.mxu0 0
      %1056 = vmatprep.subr.bf16.mxu0 0
      %1057 = vmatpush1.bf16.msra.mxu0 0
      %1058 = vmatprep.subr.bf16.mxu0 0
      %1059 = vmatpush1.bf16.msra.mxu0 0
      %1060 = vmatprep.subr.bf16.mxu0 0
      %1061 = vmatpush1.bf16.msra.mxu0 0
      %1062 = vmatprep.subr.bf16.mxu0 0
      %1063 = vmatpush1.bf16.msra.mxu0 0
      %1064 = vmatprep.subr.bf16.mxu0 0
      %1065 = vmatpush1.bf16.msra.mxu0 0
      %1066 = vmatprep.subr.bf16.mxu0 0
      %1067 = vmatpush1.bf16.msra.mxu0 0
      %1068 = vmatprep.subr.bf16.mxu0 0
      %1069 = vmatpush1.bf16.msra.mxu0 %v1052
      %1070 = vmatprep.subr.bf16.mxu0 0
      %1071 = vmatpush2.bf16.msra.mxu0 0
      %1072 = vmatprep.subr.bf16.mxu0 0
      %1073 = vmatpush2.bf16.msra.mxu0 0
      %1074 = vmatprep.subr.bf16.mxu0 0
      %1075 = vmatpush2.bf16.msra.mxu0 0
      %1076 = vmatprep.subr.bf16.mxu0 0
      %1077 = vmatpush2.bf16.msra.mxu0 0
      %1078 = vmatprep.subr.bf16.mxu0 0
      %1079 = vmatpush2.bf16.msra.mxu0 0
      %1080 = vmatprep.subr.bf16.mxu0 0
      %1081 = vmatpush2.bf16.msra.mxu0 0
      %1082 = vmatprep.subr.bf16.mxu0 0
      %1083 = vmatpush2.bf16.msra.mxu0 0
      %1084 = vmatprep.subr.bf16.mxu0 0
      %1085 = vmatpush2.bf16.msra.mxu0 0
      %1086 = vmatprep.mubr.bf16.mxu0 0
      %1087 = vmatmul.mubr.bf16.gmra.mxu0 %v1050
      %v1088 = vpop.f32.mrf.mxu0
      %v1089 = vadd.f32 0.0, %v1088
      %v1090 = vpop.f32.mrf.mxu0
      %v1091 = vpop.f32.mrf.mxu0
      %v1092 = vpop.f32.mrf.mxu0
      %1093 = vdwg.mxu0
      %v1094 = vmul.f32 %v1089, 0.0625
      %v1095 = vpack.c.bf16 %v1047, %v1047
      %1096 = vset.pattern.permute.xlu0 4
      %1097 = vperm.xlu0 %1096, %v437
      %v1098 = vpop.permute.xlu0 %1097
      %v1101 = vsel %vm553, %v431, 0
      %v1104 = vsel %vm557, %v1095, 0
      %1106 = vmatprep.subr.bf16.mxu0 0
      %1107 = vmatpush1.bf16.msra.mxu0 0
      %1108 = vmatprep.subr.bf16.mxu0 0
      %1109 = vmatpush1.bf16.msra.mxu0 0
      %1110 = vmatprep.subr.bf16.mxu0 0
      %1111 = vmatpush1.bf16.msra.mxu0 0
      %1112 = vmatprep.subr.bf16.mxu0 0
      %1113 = vmatpush1.bf16.msra.mxu0 0
      %1114 = vmatprep.subr.bf16.mxu0 0
      %1115 = vmatpush1.bf16.msra.mxu0 0
      %1116 = vmatprep.subr.bf16.mxu0 0
      %1117 = vmatpush1.bf16.msra.mxu0 0
      %1118 = vmatprep.subr.bf16.mxu0 0
      %1119 = vmatpush1.bf16.msra.mxu0 0
      %1120 = vmatprep.subr.bf16.mxu0 0
      %1121 = vmatpush1.bf16.msra.mxu0 %v1104
      %1122 = vmatprep.subr.bf16.mxu0 0
      %1123 = vmatpush2.bf16.msra.mxu0 0
      %1124 = vmatprep.subr.bf16.mxu0 0
      %1125 = vmatpush2.bf16.msra.mxu0 0
      %1126 = vmatprep.subr.bf16.mxu0 0
      %1127 = vmatpush2.bf16.msra.mxu0 0
      %1128 = vmatprep.subr.bf16.mxu0 0
      %1129 = vmatpush2.bf16.msra.mxu0 0
      %1130 = vmatprep.subr.bf16.mxu0 0
      %1131 = vmatpush2.bf16.msra.mxu0 0
      %1132 = vmatprep.subr.bf16.mxu0 0
      %1133 = vmatpush2.bf16.msra.mxu0 0
      %1134 = vmatprep.subr.bf16.mxu0 0
      %1135 = vmatpush2.bf16.msra.mxu0 0
      %1136 = vmatprep.subr.bf16.mxu0 0
      %1137 = vmatpush2.bf16.msra.mxu0 0
      %1138 = vmatprep.mubr.bf16.mxu0 0
      %1139 = vmatmul.mubr.bf16.gmra.mxu0 %v1101
      %v1140 = vpop.f32.mrf.mxu0
      %v1141 = vadd.f32 %v1098, %v1140
      %v1142 = vpop.f32.mrf.mxu0
      %v1143 = vpop.f32.mrf.mxu0
      %v1144 = vpop.f32.mrf.mxu0
      %1145 = vdwg.mxu0
      %1147 = vrot.lane.b32.xlu0 %v422, 112
      %v1148 = vpop.permute.xlu0 %1147
      %v1150 = vadd.f32 %v1141, %v1148
      %v1151 = vpack.c.bf16 %v1094, %v1094
      %1152 = vset.pattern.permute.xlu0 5
      %1153 = vperm.xlu0 %1152, %v437
      %v1154 = vpop.permute.xlu0 %1153
      %v1157 = vsel %vm553, %v432, 0
      %v1160 = vsel %vm557, %v1151, 0
      %1162 = vmatprep.subr.bf16.mxu0 0
      %1163 = vmatpush1.bf16.msra.mxu0 0
      %1164 = vmatprep.subr.bf16.mxu0 0
      %1165 = vmatpush1.bf16.msra.mxu0 0
      %1166 = vmatprep.subr.bf16.mxu0 0
      %1167 = vmatpush1.bf16.msra.mxu0 0
      %1168 = vmatprep.subr.bf16.mxu0 0
      %1169 = vmatpush1.bf16.msra.mxu0 0
      %1170 = vmatprep.subr.bf16.mxu0 0
      %1171 = vmatpush1.bf16.msra.mxu0 0
      %1172 = vmatprep.subr.bf16.mxu0 0
      %1173 = vmatpush1.bf16.msra.mxu0 0
      %1174 = vmatprep.subr.bf16.mxu0 0
      %1175 = vmatpush1.bf16.msra.mxu0 0
      %1176 = vmatprep.subr.bf16.mxu0 0
      %1177 = vmatpush1.bf16.msra.mxu0 %v1160
      %1178 = vmatprep.subr.bf16.mxu0 0
      %1179 = vmatpush2.bf16.msra.mxu0 0
      %1180 = vmatprep.subr.bf16.mxu0 0
      %1181 = vmatpush2.bf16.msra.mxu0 0
      %1182 = vmatprep.subr.bf16.mxu0 0
      %1183 = vmatpush2.bf16.msra.mxu0 0
      %1184 = vmatprep.subr.bf16.mxu0 0
      %1185 = vmatpush2.bf16.msra.mxu0 0
      %1186 = vmatprep.subr.bf16.mxu0 0
      %1187 = vmatpush2.bf16.msra.mxu0 0
      %1188 = vmatprep.subr.bf16.mxu0 0
      %1189 = vmatpush2.bf16.msra.mxu0 0
      %1190 = vmatprep.subr.bf16.mxu0 0
      %1191 = vmatpush2.bf16.msra.mxu0 0
      %1192 = vmatprep.subr.bf16.mxu0 0
      %1193 = vmatpush2.bf16.msra.mxu0 0
      %1194 = vmatprep.mubr.bf16.mxu0 0
      %1195 = vmatmul.mubr.bf16.gmra.mxu0 %v1157
      %v1196 = vpop.f32.mrf.mxu0
      %v1197 = vadd.f32 %v1154, %v1196
      %v1198 = vpop.f32.mrf.mxu0
      %v1199 = vpop.f32.mrf.mxu0
      %v1200 = vpop.f32.mrf.mxu0
      %1201 = vdwg.mxu0
      %1203 = vrot.lane.b32.xlu0 %v403, 64
      %v1204 = vpop.permute.xlu0 %1203
      %v1206 = vadd.f32 %v1197, %v1204
      %v1207 = vsel %vm900, %v1150, 0.0
      %1208 = vadd.xlane.f32.xlu0 %v1207
      %v1209 = vpop.xlane.xlu0 %1208
      %v1210 = vmul.f32 %v1209, 0.0625
      %v1211 = vsel %vm900, %v1150, -inf
      %1212 = vmax.xlane.f32.xlu0 %v1211
      %v1213 = vpop.xlane.xlu0 %1212
      %v1214 = vsel %vm769, %v1210, %v1213
      %v1215 = vpack.c.bf16 %v1214, %v1214
      %1216 = vset.pattern.permute.xlu0 6
      %1217 = vperm.xlu0 %1216, %v437
      %v1218 = vpop.permute.xlu0 %1217
      %v1221 = vsel %vm553, %v433, 0
      %v1224 = vsel %vm557, %v1215, 0
      %1226 = vmatprep.subr.bf16.mxu0 0
      %1227 = vmatpush1.bf16.msra.mxu0 0
      %1228 = vmatprep.subr.bf16.mxu0 0
      %1229 = vmatpush1.bf16.msra.mxu0 0
      %1230 = vmatprep.subr.bf16.mxu0 0
      %1231 = vmatpush1.bf16.msra.mxu0 0
      %1232 = vmatprep.subr.bf16.mxu0 0
      %1233 = vmatpush1.bf16.msra.mxu0 0
      %1234 = vmatprep.subr.bf16.mxu0 0
      %1235 = vmatpush1.bf16.msra.mxu0 0
      %1236 = vmatprep.subr.bf16.mxu0 0
      %1237 = vmatpush1.bf16.msra.mxu0 0
      %1238 = vmatprep.subr.bf16.mxu0 0
      %1239 = vmatpush1.bf16.msra.mxu0 0
      %1240 = vmatprep.subr.bf16.mxu0 0
      %1241 = vmatpush1.bf16.msra.mxu0 %v1224
      %1242 = vmatprep.subr.bf16.mxu0 0
      %1243 = vmatpush2.bf16.msra.mxu0 0
      %1244 = vmatprep.subr.bf16.mxu0 0
      %1245 = vmatpush2.bf16.msra.mxu0 0
      %1246 = vmatprep.subr.bf16.mxu0 0
      %1247 = vmatpush2.bf16.msra.mxu0 0
      %1248 = vmatprep.subr.bf16.mxu0 0
      %1249 = vmatpush2.bf16.msra.mxu0 0
      %1250 = vmatprep.subr.bf16.mxu0 0
      %1251 = vmatpush2.bf16.msra.mxu0 0
      %1252 = vmatprep.subr.bf16.mxu0 0
      %1253 = vmatpush2.bf16.msra.mxu0 0
      %1254 = vmatprep.subr.bf16.mxu0 0
      %1255 = vmatpush2.bf16.msra.mxu0 0
      %1256 = vmatprep.subr.bf16.mxu0 0
      %1257 = vmatpush2.bf16.msra.mxu0 0
      %1258 = vmatprep.mubr.bf16.mxu0 0
      %1259 = vmatmul.mubr.bf16.gmra.mxu0 %v1221
      %v1260 = vpop.f32.mrf.mxu0
      %v1261 = vadd.f32 %v1218, %v1260
      %v1262 = vpop.f32.mrf.mxu0
      %v1263 = vpop.f32.mrf.mxu0
      %v1264 = vpop.f32.mrf.mxu0
      %1265 = vdwg.mxu0
      %v1266 = vmax.f32 %v1261, 0.0
      %v1267 = vpack.c.bf16 %v1266, %v1266
      %1268 = vset.pattern.permute.xlu0 7
      %1269 = vperm.xlu0 %1268, %v437
      %v1270 = vpop.permute.xlu0 %1269
      %v1273 = vsel %vm553, %v434, 0
      %v1276 = vsel %vm557, %v1267, 0
      %1278 = vmatprep.subr.bf16.mxu0 0
      %1279 = vmatpush1.bf16.msra.mxu0 0
      %1280 = vmatprep.subr.bf16.mxu0 0
      %1281 = vmatpush1.bf16.msra.mxu0 0
      %1282 = vmatprep.subr.bf16.mxu0 0
      %1283 = vmatpush1.bf16.msra.mxu0 0
      %1284 = vmatprep.subr.bf16.mxu0 0
      %1285 = vmatpush1.bf16.msra.mxu0 0
      %1286 = vmatprep.subr.bf16.mxu0 0
      %1287 = vmatpush1.bf16.msra.mxu0 0
      %1288 = vmatprep.subr.bf16.mxu0 0
      %1289 = vmatpush1.bf16.msra.mxu0 0
      %1290 = vmatprep.subr.bf16.mxu0 0
      %1291 = vmatpush1.bf16.msra.mxu0 0
      %1292 = vmatprep.subr.bf16.mxu0 0
      %1293 = vmatpush1.bf16.msra.mxu0 %v1276
      %1294 = vmatprep.subr.bf16.mxu0 0
      %1295 = vmatpush2.bf16.msra.mxu0 0
      %1296 = vmatprep.subr.bf16.mxu0 0
      %1297 = vmatpush2.bf16.msra.mxu0 0
      %1298 = vmatprep.subr.bf16.mxu0 0
      %1299 = vmatpush2.bf16.msra.mxu0 0
      %1300 = vmatprep.subr.bf16.mxu0 0
      %1301 = vmatpush2.bf16.msra.mxu0 0
      %1302 = vmatprep.subr.bf16.mxu0 0
      %1303 = vmatpush2.bf16.msra.mxu0 0
      %1304 = vmatprep.subr.bf16.mxu0 0
      %1305 = vmatpush2.bf16.msra.mxu0 0
      %1306 = vmatprep.subr.bf16.mxu0 0
      %1307 = vmatpush2.bf16.msra.mxu0 0
      %1308 = vmatprep.subr.bf16.mxu0 0
      %1309 = vmatpush2.bf16.msra.mxu0 0
      %1310 = vmatprep.mubr.bf16.mxu0 0
      %1311 = vmatmul.mubr.bf16.gmra.mxu0 %v1273
      %v1312 = vpop.f32.mrf.mxu0
      %v1313 = vadd.f32 %v1270, %v1312
      %v1314 = vpop.f32.mrf.mxu0
      %v1315 = vpop.f32.mrf.mxu0
      %v1316 = vpop.f32.mrf.mxu0
      %1317 = vdwg.mxu0
      %1319 = vrot.lane.b32.xlu0 %v1313, 127
      %v1320 = vpop.permute.xlu0 %1319
      %v1322 = vadd.f32 %v1313, %v1320
      %v1323 = vxor.u32 %v1322, 2147483648
      %v1324 = vmul.f32 %v1323, 1.442695
      %v1325 = vpow.pop %v1324
      %v1326 = vadd.f32 %v1325, 1.0
      %v1327 = vrcp.pop %v1326
      %v1328 = vmul.f32 1.0, %v1327
      %1330 = vset.pattern.permute.xlu0 0
      %1331 = vperm.xlu0 %1330, %v1328
      %v1332 = vpop.permute.xlu0 %1331
      %v1334 = vmul.f32 %v1206, %v1332
      %v1335 = vmul.f32 %v1150, %v1332
      %v1336 = vpack.c.bf16 %v890, %v890
      %v1338 = vsel %vm553, %v435, 0
      %v1341 = vsel %vm557, %v1336, 0
      %1343 = vmatprep.subr.bf16.mxu0 0
      %1344 = vmatpush1.bf16.msra.mxu0 0
      %1345 = vmatprep.subr.bf16.mxu0 0
      %1346 = vmatpush1.bf16.msra.mxu0 0
      %1347 = vmatprep.subr.bf16.mxu0 0
      %1348 = vmatpush1.bf16.msra.mxu0 0
      %1349 = vmatprep.subr.bf16.mxu0 0
      %1350 = vmatpush1.bf16.msra.mxu0 0
      %1351 = vmatprep.subr.bf16.mxu0 0
      %1352 = vmatpush1.bf16.msra.mxu0 0
      %1353 = vmatprep.subr.bf16.mxu0 0
      %1354 = vmatpush1.bf16.msra.mxu0 0
      %1355 = vmatprep.subr.bf16.mxu0 0
      %1356 = vmatpush1.bf16.msra.mxu0 0
      %1357 = vmatprep.subr.bf16.mxu0 0
      %1358 = vmatpush1.bf16.msra.mxu0 %v1341
      %1359 = vmatprep.subr.bf16.mxu0 0
      %1360 = vmatpush2.bf16.msra.mxu0 0
      %1361 = vmatprep.subr.bf16.mxu0 0
      %1362 = vmatpush2.bf16.msra.mxu0 0
      %1363 = vmatprep.subr.bf16.mxu0 0
      %1364 = vmatpush2.bf16.msra.mxu0 0
      %1365 = vmatprep.subr.bf16.mxu0 0
      %1366 = vmatpush2.bf16.msra.mxu0 0
      %1367 = vmatprep.subr.bf16.mxu0 0
      %1368 = vmatpush2.bf16.msra.mxu0 0
      %1369 = vmatprep.subr.bf16.mxu0 0
      %1370 = vmatpush2.bf16.msra.mxu0 0
      %1371 = vmatprep.subr.bf16.mxu0 0
      %1372 = vmatpush2.bf16.msra.mxu0 0
      %1373 = vmatprep.subr.bf16.mxu0 0
      %1374 = vmatpush2.bf16.msra.mxu0 0
      %1375 = vmatprep.mubr.bf16.mxu0 0
      %1376 = vmatmul.mubr.bf16.gmra.mxu0 %v1338
      %v1377 = vpop.f32.mrf.mxu0
      %v1378 = vadd.f32 0.0, %v1377
      %v1379 = vpop.f32.mrf.mxu0
      %v1380 = vpop.f32.mrf.mxu0
      %v1381 = vpop.f32.mrf.mxu0
      %1382 = vdwg.mxu0
      %v1383 = vpack.c.bf16 %v891, %v891
      %v1385 = vunpack.c.l.b16 %v435
      %v1386 = vpack.c.b16 %v1385, %v1385
      %1387 = vrot.lane.b32.xlu0 %v1386, 120
      %v1388 = vpop.permute.xlu0 %1387
      %v1390 = vsel %vm553, %v1388, 0
      %v1393 = vsel %vm557, %v1383, 0
      %1395 = vmatprep.subr.bf16.mxu0 0
      %1396 = vmatpush1.bf16.msra.mxu0 0
      %1397 = vmatprep.subr.bf16.mxu0 0
      %1398 = vmatpush1.bf16.msra.mxu0 0
      %1399 = vmatprep.subr.bf16.mxu0 0
      %1400 = vmatpush1.bf16.msra.mxu0 0
      %1401 = vmatprep.subr.bf16.mxu0 0
      %1402 = vmatpush1.bf16.msra.mxu0 0
      %1403 = vmatprep.subr.bf16.mxu0 0
      %1404 = vmatpush1.bf16.msra.mxu0 0
      %1405 = vmatprep.subr.bf16.mxu0 0
      %1406 = vmatpush1.bf16.msra.mxu0 0
      %1407 = vmatprep.subr.bf16.mxu0 0
      %1408 = vmatpush1.bf16.msra.mxu0 0
      %1409 = vmatprep.subr.bf16.mxu0 0
      %1410 = vmatpush1.bf16.msra.mxu0 %v1393
      %1411 = vmatprep.subr.bf16.mxu0 0
      %1412 = vmatpush2.bf16.msra.mxu0 0
      %1413 = vmatprep.subr.bf16.mxu0 0
      %1414 = vmatpush2.bf16.msra.mxu0 0
      %1415 = vmatprep.subr.bf16.mxu0 0
      %1416 = vmatpush2.bf16.msra.mxu0 0
      %1417 = vmatprep.subr.bf16.mxu0 0
      %1418 = vmatpush2.bf16.msra.mxu0 0
      %1419 = vmatprep.subr.bf16.mxu0 0
      %1420 = vmatpush2.bf16.msra.mxu0 0
      %1421 = vmatprep.subr.bf16.mxu0 0
      %1422 = vmatpush2.bf16.msra.mxu0 0
      %1423 = vmatprep.subr.bf16.mxu0 0
      %1424 = vmatpush2.bf16.msra.mxu0 0
      %1425 = vmatprep.subr.bf16.mxu0 0
      %1426 = vmatpush2.bf16.msra.mxu0 0
      %1427 = vmatprep.mubr.bf16.mxu0 0
      %1428 = vmatmul.mubr.bf16.gmra.mxu0 %v1390
      %v1429 = vpop.f32.mrf.mxu0
      %v1430 = vadd.f32 0.0, %v1429
      %v1431 = vpop.f32.mrf.mxu0
      %v1432 = vpop.f32.mrf.mxu0
      %v1433 = vpop.f32.mrf.mxu0
      %1434 = vdwg.mxu0
      %v1435 = vpack.c.bf16 %v1334, %v1334
      %v1437 = vsel %vm553, %v436, 0
      %v1440 = vsel %vm557, %v1435, 0
      %1442 = vmatprep.subr.bf16.mxu0 0
      %1443 = vmatpush1.bf16.msra.mxu0 0
      %1444 = vmatprep.subr.bf16.mxu0 0
      %1445 = vmatpush1.bf16.msra.mxu0 0
      %1446 = vmatprep.subr.bf16.mxu0 0
      %1447 = vmatpush1.bf16.msra.mxu0 0
      %1448 = vmatprep.subr.bf16.mxu0 0
      %1449 = vmatpush1.bf16.msra.mxu0 0
      %1450 = vmatprep.subr.bf16.mxu0 0
      %1451 = vmatpush1.bf16.msra.mxu0 0
      %1452 = vmatprep.subr.bf16.mxu0 0
      %1453 = vmatpush1.bf16.msra.mxu0 0
      %1454 = vmatprep.subr.bf16.mxu0 0
      %1455 = vmatpush1.bf16.msra.mxu0 0
      %1456 = vmatprep.subr.bf16.mxu0 0
      %1457 = vmatpush1.bf16.msra.mxu0 %v1440
      %1458 = vmatprep.subr.bf16.mxu0 0
      %1459 = vmatpush2.bf16.msra.mxu0 0
      %1460 = vmatprep.subr.bf16.mxu0 0
      %1461 = vmatpush2.bf16.msra.mxu0 0
      %1462 = vmatprep.subr.bf16.mxu0 0
      %1463 = vmatpush2.bf16.msra.mxu0 0
      %1464 = vmatprep.subr.bf16.mxu0 0
      %1465 = vmatpush2.bf16.msra.mxu0 0
      %1466 = vmatprep.subr.bf16.mxu0 0
      %1467 = vmatpush2.bf16.msra.mxu0 0
      %1468 = vmatprep.subr.bf16.mxu0 0
      %1469 = vmatpush2.bf16.msra.mxu0 0
      %1470 = vmatprep.subr.bf16.mxu0 0
      %1471 = vmatpush2.bf16.msra.mxu0 0
      %1472 = vmatprep.subr.bf16.mxu0 0
      %1473 = vmatpush2.bf16.msra.mxu0 0
      %1474 = vmatprep.mubr.bf16.mxu0 0
      %1475 = vmatmul.mubr.bf16.gmra.mxu0 %v1437
      %v1476 = vpop.f32.mrf.mxu0
      %v1477 = vadd.f32 0.0, %v1476
      %v1478 = vpop.f32.mrf.mxu0
      %v1479 = vpop.f32.mrf.mxu0
      %v1480 = vpop.f32.mrf.mxu0
      %1481 = vdwg.mxu0
      %v1482 = vpack.c.bf16 %v1335, %v1335
      %v1484 = vunpack.c.l.b16 %v436
      %v1485 = vpack.c.b16 %v1484, %v1484
      %1486 = vrot.lane.b32.xlu0 %v1485, 120
      %v1487 = vpop.permute.xlu0 %1486
      %v1489 = vsel %vm553, %v1487, 0
      %v1492 = vsel %vm557, %v1482, 0
      %1494 = vmatprep.subr.bf16.mxu0 0
      %1495 = vmatpush1.bf16.msra.mxu0 0
      %1496 = vmatprep.subr.bf16.mxu0 0
      %1497 = vmatpush1.bf16.msra.mxu0 0
      %1498 = vmatprep.subr.bf16.mxu0 0
      %1499 = vmatpush1.bf16.msra.mxu0 0
      %1500 = vmatprep.subr.bf16.mxu0 0
      %1501 = vmatpush1.bf16.msra.mxu0 0
      %1502 = vmatprep.subr.bf16.mxu0 0
      %1503 = vmatpush1.bf16.msra.mxu0 0
      %1504 = vmatprep.subr.bf16.mxu0 0
      %1505 = vmatpush1.bf16.msra.mxu0 0
      %1506 = vmatprep.subr.bf16.mxu0 0
      %1507 = vmatpush1.bf16.msra.mxu0 0
      %1508 = vmatprep.subr.bf16.mxu0 0
      %1509 = vmatpush1.bf16.msra.mxu0 %v1492
      %1510 = vmatprep.subr.bf16.mxu0 0
      %1511 = vmatpush2.bf16.msra.mxu0 0
      %1512 = vmatprep.subr.bf16.mxu0 0
      %1513 = vmatpush2.bf16.msra.mxu0 0
      %1514 = vmatprep.subr.bf16.mxu0 0
      %1515 = vmatpush2.bf16.msra.mxu0 0
      %1516 = vmatprep.subr.bf16.mxu0 0
      %1517 = vmatpush2.bf16.msra.mxu0 0
      %1518 = vmatprep.subr.bf16.mxu0 0
      %1519 = vmatpush2.bf16.msra.mxu0 0
      %1520 = vmatprep.subr.bf16.mxu0 0
      %1521 = vmatpush2.bf16.msra.mxu0 0
      %1522 = vmatprep.subr.bf16.mxu0 0
      %1523 = vmatpush2.bf16.msra.mxu0 0
      %1524 = vmatprep.subr.bf16.mxu0 0
      %1525 = vmatpush2.bf16.msra.mxu0 0
      %1526 = vmatprep.mubr.bf16.mxu0 0
      %1527 = vmatmul.mubr.bf16.gmra.mxu0 %v1489
      %v1528 = vpop.f32.mrf.mxu0
      %v1529 = vadd.f32 0.0, %v1528
      %v1530 = vpop.f32.mrf.mxu0
      %v1531 = vpop.f32.mrf.mxu0
      %v1532 = vpop.f32.mrf.mxu0
      %1533 = vdwg.mxu0
      %v1534 = vld [vmem:[%s5] sm:$0xff]
      %v1535 = vld [vmem:[%s5 + $0x8] sm:$0xff]
      %v1536 = vld [vmem:[%s5 + $0x10] sm:$0xff]
      %v1537 = vld [vmem:[%s5 + $0x18] sm:$0xff]
      %v1538 = vld [vmem:[%s5 + $0x20] sm:$0xff]
      %v1539 = vld [vmem:[%s5 + $0x28] sm:$0xff]
      %v1540 = vld [vmem:[%s5 + $0x30] sm:$0xff]
      %v1541 = vld [vmem:[%s5 + $0x38] sm:$0xff]
      %v1542 = vld [vmem:[%s5 + $0x40] sm:$0xff]
      %v1543 = vld [vmem:[%s5 + $0x48] sm:$0xff]
      %v1544 = vld [vmem:[%s5 + $0x50] sm:$0xff]
      %v1545 = vld [vmem:[%s5 + $0x58] sm:$0xff]
      %v1546 = vld [vmem:[%s5 + $0x60] sm:$0xff]
      %v1547 = vld [vmem:[%s5 + $0x68] sm:$0xff]
      %v1548 = vld [vmem:[%s5 + $0x70] sm:$0xff]
      %v1549 = vld [vmem:[%s5 + $0x78] sm:$0xff]
      %v1550 = vld [vmem:[%s6] sm:$0xff]
      %v1551 = vld [vmem:[%s6 + $0x8] sm:$0xff]
      %v1552 = vld [vmem:[%s6 + $0x10] sm:$0xff]
      %v1553 = vld [vmem:[%s6 + $0x18] sm:$0xff]
      %v1554 = vpack.c.bf16 %v1378, %v1378
      %v1555 = vpack.c.bf16 %v1430, %v1430
      %v1564 = vunpack.c.l.b16 %v1542
      %v1565 = vunpack.c.h.b16 %v1542
      %v1566 = vunpack.c.l.b16 %v1543
      %v1567 = vunpack.c.h.b16 %v1543
      %v1568 = vunpack.c.l.b16 %v1544
      %v1569 = vunpack.c.h.b16 %v1544
      %v1570 = vunpack.c.l.b16 %v1545
      %v1571 = vunpack.c.h.b16 %v1545
      %v1572 = vunpack.c.l.b16 %v1546
      %v1573 = vunpack.c.h.b16 %v1546
      %v1574 = vunpack.c.l.b16 %v1547
      %v1575 = vunpack.c.h.b16 %v1547
      %v1576 = vunpack.c.l.b16 %v1548
      %v1577 = vunpack.c.h.b16 %v1548
      %v1578 = vunpack.c.l.b16 %v1549
      %v1579 = vunpack.c.h.b16 %v1549
      %v1580 = vpack.c.b16 %v1566, %v1564
      %v1581 = vpack.c.b16 %v1567, %v1565
      %v1582 = vpack.c.b16 %v1570, %v1568
      %v1583 = vpack.c.b16 %v1571, %v1569
      %v1584 = vpack.c.b16 %v1574, %v1572
      %v1585 = vpack.c.b16 %v1575, %v1573
      %v1586 = vpack.c.b16 %v1578, %v1576
      %v1587 = vpack.c.b16 %v1579, %v1577
      %v1597 = vsel %vm440, %v1555, 0
      %1599 = vmatprep.subr.bf16.mxu0 0
      %1600 = vmatpush1.bf16.msra.mxu0 0
      %1601 = vmatprep.subr.bf16.mxu0 0
      %1602 = vmatpush1.bf16.msra.mxu0 0
      %1603 = vmatprep.subr.bf16.mxu0 0
      %1604 = vmatpush1.bf16.msra.mxu0 0
      %1605 = vmatprep.subr.bf16.mxu0 0
      %1606 = vmatpush1.bf16.msra.mxu0 0
      %1607 = vmatprep.subr.bf16.mxu0 %v1587
      %1608 = vmatpush1.bf16.msra.mxu0 %v1586
      %1609 = vmatprep.subr.bf16.mxu0 %v1585
      %1610 = vmatpush1.bf16.msra.mxu0 %v1584
      %1611 = vmatprep.subr.bf16.mxu0 %v1583
      %1612 = vmatpush1.bf16.msra.mxu0 %v1582
      %1613 = vmatprep.subr.bf16.mxu0 %v1581
      %1614 = vmatpush1.bf16.msra.mxu0 %v1580
      %1615 = vmatprep.subr.bf16.mxu0 0
      %1616 = vmatpush2.bf16.msra.mxu0 0
      %1617 = vmatprep.subr.bf16.mxu0 0
      %1618 = vmatpush2.bf16.msra.mxu0 0
      %1619 = vmatprep.subr.bf16.mxu0 0
      %1620 = vmatpush2.bf16.msra.mxu0 0
      %1621 = vmatprep.subr.bf16.mxu0 0
      %1622 = vmatpush2.bf16.msra.mxu0 0
      %1623 = vmatprep.subr.bf16.mxu0 0
      %1624 = vmatpush2.bf16.msra.mxu0 0
      %1625 = vmatprep.subr.bf16.mxu0 0
      %1626 = vmatpush2.bf16.msra.mxu0 0
      %1627 = vmatprep.subr.bf16.mxu0 0
      %1628 = vmatpush2.bf16.msra.mxu0 0
      %1629 = vmatprep.subr.bf16.mxu0 0
      %1630 = vmatpush2.bf16.msra.mxu0 0
      %1631 = vmatprep.mubr.bf16.mxu0 0
      %1632 = vmatmul.mubr.bf16.gmra.mxu0 %v1597
      %v1633 = vpop.f32.mrf.mxu0
      %v1634 = vadd.f32 0.0, %v1633
      %v1635 = vpop.f32.mrf.mxu0
      %v1636 = vadd.f32 0.0, %v1635
      %v1637 = vpop.f32.mrf.mxu0
      %v1638 = vpop.f32.mrf.mxu0
      %1639 = vdwg.mxu0
      %v1648 = vunpack.c.l.b16 %v1534
      %v1649 = vunpack.c.h.b16 %v1534
      %v1650 = vunpack.c.l.b16 %v1535
      %v1651 = vunpack.c.h.b16 %v1535
      %v1652 = vunpack.c.l.b16 %v1536
      %v1653 = vunpack.c.h.b16 %v1536
      %v1654 = vunpack.c.l.b16 %v1537
      %v1655 = vunpack.c.h.b16 %v1537
      %v1656 = vunpack.c.l.b16 %v1538
      %v1657 = vunpack.c.h.b16 %v1538
      %v1658 = vunpack.c.l.b16 %v1539
      %v1659 = vunpack.c.h.b16 %v1539
      %v1660 = vunpack.c.l.b16 %v1540
      %v1661 = vunpack.c.h.b16 %v1540
      %v1662 = vunpack.c.l.b16 %v1541
      %v1663 = vunpack.c.h.b16 %v1541
      %v1664 = vpack.c.b16 %v1650, %v1648
      %v1665 = vpack.c.b16 %v1651, %v1649
      %v1666 = vpack.c.b16 %v1654, %v1652
      %v1667 = vpack.c.b16 %v1655, %v1653
      %v1668 = vpack.c.b16 %v1658, %v1656
      %v1669 = vpack.c.b16 %v1659, %v1657
      %v1670 = vpack.c.b16 %v1662, %v1660
      %v1671 = vpack.c.b16 %v1663, %v1661
      %v1681 = vsel %vm440, %v1554, 0
      %1683 = vmatprep.subr.bf16.mxu0 0
      %1684 = vmatpush1.bf16.msra.mxu0 0
      %1685 = vmatprep.subr.bf16.mxu0 0
      %1686 = vmatpush1.bf16.msra.mxu0 0
      %1687 = vmatprep.subr.bf16.mxu0 0
      %1688 = vmatpush1.bf16.msra.mxu0 0
      %1689 = vmatprep.subr.bf16.mxu0 0
      %1690 = vmatpush1.bf16.msra.mxu0 0
      %1691 = vmatprep.subr.bf16.mxu0 %v1671
      %1692 = vmatpush1.bf16.msra.mxu0 %v1670
      %1693 = vmatprep.subr.bf16.mxu0 %v1669
      %1694 = vmatpush1.bf16.msra.mxu0 %v1668
      %1695 = vmatprep.subr.bf16.mxu0 %v1667
      %1696 = vmatpush1.bf16.msra.mxu0 %v1666
      %1697 = vmatprep.subr.bf16.mxu0 %v1665
      %1698 = vmatpush1.bf16.msra.mxu0 %v1664
      %1699 = vmatprep.subr.bf16.mxu0 0
      %1700 = vmatpush2.bf16.msra.mxu0 0
      %1701 = vmatprep.subr.bf16.mxu0 0
      %1702 = vmatpush2.bf16.msra.mxu0 0
      %1703 = vmatprep.subr.bf16.mxu0 0
      %1704 = vmatpush2.bf16.msra.mxu0 0
      %1705 = vmatprep.subr.bf16.mxu0 0
      %1706 = vmatpush2.bf16.msra.mxu0 0
      %1707 = vmatprep.subr.bf16.mxu0 0
      %1708 = vmatpush2.bf16.msra.mxu0 0
      %1709 = vmatprep.subr.bf16.mxu0 0
      %1710 = vmatpush2.bf16.msra.mxu0 0
      %1711 = vmatprep.subr.bf16.mxu0 0
      %1712 = vmatpush2.bf16.msra.mxu0 0
      %1713 = vmatprep.subr.bf16.mxu0 0
      %1714 = vmatpush2.bf16.msra.mxu0 0
      %1715 = vmatprep.mubr.bf16.mxu0 0
      %1716 = vmatmul.mubr.bf16.gmra.mxu0 %v1681
      %v1717 = vpop.f32.mrf.mxu0
      %v1718 = vadd.f32 %v1634, %v1717
      %v1719 = vpop.f32.mrf.mxu0
      %v1720 = vadd.f32 %v1636, %v1719
      %v1721 = vpop.f32.mrf.mxu0
      %v1722 = vpop.f32.mrf.mxu0
      %1723 = vdwg.mxu0
      %1724 = vset.pattern.permute.xlu0 8
      %1725 = vperm.xlu0 %1724, %v437
      %v1726 = vpop.permute.xlu0 %1725
      %v1728 = vadd.f32 %v1718, %v1726
      %v1729 = vadd.f32 %v1720, %v1726
      %v1730 = vpack.c.bf16 %v1477, %v1477
      %v1731 = vpack.c.bf16 %v1529, %v1529
      %v1734 = vunpack.c.l.b16 %v1552
      %v1735 = vunpack.c.h.b16 %v1552
      %v1736 = vunpack.c.l.b16 %v1553
      %v1737 = vunpack.c.h.b16 %v1553
      %v1738 = vpack.c.b16 %v1736, %v1734
      %v1739 = vpack.c.b16 %v1737, %v1735
      %v1743 = vsel %vm900, %v1731, 0
      %1745 = vmatprep.subr.bf16.mxu0 0
      %1746 = vmatpush1.bf16.msra.mxu0 0
      %1747 = vmatprep.subr.bf16.mxu0 0
      %1748 = vmatpush1.bf16.msra.mxu0 0
      %1749 = vmatprep.subr.bf16.mxu0 0
      %1750 = vmatpush1.bf16.msra.mxu0 0
      %1751 = vmatprep.subr.bf16.mxu0 0
      %1752 = vmatpush1.bf16.msra.mxu0 0
      %1753 = vmatprep.subr.bf16.mxu0 0
      %1754 = vmatpush1.bf16.msra.mxu0 0
      %1755 = vmatprep.subr.bf16.mxu0 0
      %1756 = vmatpush1.bf16.msra.mxu0 0
      %1757 = vmatprep.subr.bf16.mxu0 0
      %1758 = vmatpush1.bf16.msra.mxu0 0
      %1759 = vmatprep.subr.bf16.mxu0 %v1739
      %1760 = vmatpush1.bf16.msra.mxu0 %v1738
      %1761 = vmatprep.subr.bf16.mxu0 0
      %1762 = vmatpush2.bf16.msra.mxu0 0
      %1763 = vmatprep.subr.bf16.mxu0 0
      %1764 = vmatpush2.bf16.msra.mxu0 0
      %1765 = vmatprep.subr.bf16.mxu0 0
      %1766 = vmatpush2.bf16.msra.mxu0 0
      %1767 = vmatprep.subr.bf16.mxu0 0
      %1768 = vmatpush2.bf16.msra.mxu0 0
      %1769 = vmatprep.subr.bf16.mxu0 0
      %1770 = vmatpush2.bf16.msra.mxu0 0
      %1771 = vmatprep.subr.bf16.mxu0 0
      %1772 = vmatpush2.bf16.msra.mxu0 0
      %1773 = vmatprep.subr.bf16.mxu0 0
      %1774 = vmatpush2.bf16.msra.mxu0 0
      %1775 = vmatprep.subr.bf16.mxu0 0
      %1776 = vmatpush2.bf16.msra.mxu0 0
      %1777 = vmatprep.mubr.bf16.mxu0 0
      %1778 = vmatmul.mubr.bf16.gmra.mxu0 %v1743
      %v1779 = vpop.f32.mrf.mxu0
      %v1780 = vadd.f32 0.0, %v1779
      %v1781 = vpop.f32.mrf.mxu0
      %v1782 = vadd.f32 0.0, %v1781
      %v1783 = vpop.f32.mrf.mxu0
      %v1784 = vpop.f32.mrf.mxu0
      %1785 = vdwg.mxu0
      %v1788 = vunpack.c.l.b16 %v1550
      %v1789 = vunpack.c.h.b16 %v1550
      %v1790 = vunpack.c.l.b16 %v1551
      %v1791 = vunpack.c.h.b16 %v1551
      %v1792 = vpack.c.b16 %v1790, %v1788
      %v1793 = vpack.c.b16 %v1791, %v1789
      %v1797 = vsel %vm900, %v1730, 0
      %1799 = vmatprep.subr.bf16.mxu0 0
      %1800 = vmatpush1.bf16.msra.mxu0 0
      %1801 = vmatprep.subr.bf16.mxu0 0
      %1802 = vmatpush1.bf16.msra.mxu0 0
      %1803 = vmatprep.subr.bf16.mxu0 0
      %1804 = vmatpush1.bf16.msra.mxu0 0
      %1805 = vmatprep.subr.bf16.mxu0 0
      %1806 = vmatpush1.bf16.msra.mxu0 0
      %1807 = vmatprep.subr.bf16.mxu0 0
      %1808 = vmatpush1.bf16.msra.mxu0 0
      %1809 = vmatprep.subr.bf16.mxu0 0
      %1810 = vmatpush1.bf16.msra.mxu0 0
      %1811 = vmatprep.subr.bf16.mxu0 0
      %1812 = vmatpush1.bf16.msra.mxu0 0
      %1813 = vmatprep.subr.bf16.mxu0 %v1793
      %1814 = vmatpush1.bf16.msra.mxu0 %v1792
      %1815 = vmatprep.subr.bf16.mxu0 0
      %1816 = vmatpush2.bf16.msra.mxu0 0
      %1817 = vmatprep.subr.bf16.mxu0 0
      %1818 = vmatpush2.bf16.msra.mxu0 0
      %1819 = vmatprep.subr.bf16.mxu0 0
      %1820 = vmatpush2.bf16.msra.mxu0 0
      %1821 = vmatprep.subr.bf16.mxu0 0
      %1822 = vmatpush2.bf16.msra.mxu0 0
      %1823 = vmatprep.subr.bf16.mxu0 0
      %1824 = vmatpush2.bf16.msra.mxu0 0
      %1825 = vmatprep.subr.bf16.mxu0 0
      %1826 = vmatpush2.bf16.msra.mxu0 0
      %1827 = vmatprep.subr.bf16.mxu0 0
      %1828 = vmatpush2.bf16.msra.mxu0 0
      %1829 = vmatprep.subr.bf16.mxu0 0
      %1830 = vmatpush2.bf16.msra.mxu0 0
      %1831 = vmatprep.mubr.bf16.mxu0 0
      %1832 = vmatmul.mubr.bf16.gmra.mxu0 %v1797
      %v1833 = vpop.f32.mrf.mxu0
      %v1834 = vadd.f32 %v1780, %v1833
      %v1835 = vpop.f32.mrf.mxu0
      %v1836 = vadd.f32 %v1782, %v1835
      %v1837 = vpop.f32.mrf.mxu0
      %v1838 = vpop.f32.mrf.mxu0
      %1839 = vdwg.mxu0
      %1840 = vset.pattern.permute.xlu0 9
      %1841 = vperm.xlu0 %1840, %v437
      %v1842 = vpop.permute.xlu0 %1841
      %v1844 = vadd.f32 %v1834, %v1842
      %v1845 = vadd.f32 %v1836, %v1842
      %1848 = vrot.lane.b32.xlu0 %v1844, 68
      %v1849 = vpop.permute.xlu0 %1848
      %1850 = vrot.lane.b32.xlu0 %v1845, 68
      %v1851 = vpop.permute.xlu0 %1850
      %vm1852 = vcmask 556032
      %v1853 = vsel %vm1852, %v1849, %v1851
      %1858 = vrot.lane.b32.xlu0 %v891, 8
      %v1859 = vpop.permute.xlu0 %1858
      %1862 = vrot.lane.b32.xlu0 %v1335, 72
      %v1863 = vpop.permute.xlu0 %1862
      %v1865 = vsel %vm1852, %v1729, %v1849
      %v1866 = vsel %vm553, %v1851, %v1859
      %vm1867 = vcmask 588800
      %v1868 = vsel %vm1867, %v1866, %v1863
      %vm1869 = vcmask 719872
      %v1870 = vsel %vm1869, %v1868, 0.0
      %1871 = vst [vmem:[%s278] sm:$0xff] %v1728
      %1872 = vst [vmem:[%s278 + $0x8] sm:$0xff] %v1865
      %1873 = vst [vmem:[%s278 + $0x10] sm:$0xff] %v1853
      %1874 = vst [vmem:[%s278 + $0x18] sm:$0xff] %v1870
      %p1875 = scmp.lt.s32.totalorder %s18, 1
      %s1876 = scalar_select %p1875, %s18, 1
      %s1877 = smul.addr %s1876, 4
      %s1878 = smul.addr %s1877, 8
      %s1879 = scalar_lea.vmem %s7, %s1878
      // Predicated region
      $region49: #{seg_r_forward.1} parent=47 // pred_check
        %p1880 = pneg %p188
      $region50: #{seg_r_forward.1} parent=47 // pred_check_branch
        %1882 = sbr.rel (%p1880) target = $region52
      $region51: #{seg_r_forward.1} parent=47 // pred_region
        _
      $region52: #{seg_r_forward.1} parent=47 // pred_fallthru
        _
    $region48: #{seg_r_forward.1} parent=5 // pred_fallthru
      _
    %p1883 = scmp.le.s32.totalorder 2, %s13
    // Predicated region
    $region53: #{seg_r_forward.1} parent=5 // pred_check
      %p1884 = pneg %p1883
    $region54: #{seg_r_forward.1} parent=5 // pred_check_branch
      %1886 = sbr.rel (%p1884) target = $region56
    $region55: #{seg_r_forward.1} parent=5 // pred_region
      %s1887 = ssub.s32 %s13, 2
      // Predicated region
      $region57: #{seg_r_forward.1} parent=55 // pred_check
        %p1888 = pneg %p194
      $region58: #{seg_r_forward.1} parent=55 // pred_check_branch
        %1890 = sbr.rel (%p1888) target = $region60
      $region59: #{seg_r_forward.1} parent=55 // pred_region
        %p1891 = scmp.lt.s32.totalorder %s19, 1
        %s1892 = scalar_select %p1891, %s19, 1
        %s1893 = smul.addr %s1892, 4
        %s1894 = smul.addr %s1893, 8
        %s1895 = scalar_lea.vmem %s7, %s1894
      $region60: #{seg_r_forward.1} parent=55 // pred_fallthru
        _
    $region56: #{seg_r_forward.1} parent=5 // pred_fallthru
      _
  $region6: #{seg_r_forward.1} parent=0 // loop_footer
    %s17 = sadd.s32 1, %s13
  $region7: #{seg_r_forward.1} parent=0 // loop_footer_branch
    %12 = sbr.rel target = $region3
  $region8: #{seg_r_forward.1} parent=0 // loop_exit
    _

</llo_original>
